<compile_context>
chip_gen: v6e
topology: v6e:2x2x1
jax: 0.10.0
libtpu: 0.0.40
codegen_flags: <defaults>
</compile_context>

<pallas_src>
import jax
import jax.numpy as jnp
from jax.experimental import pallas as pl
from jax.experimental.pallas import tpu as pltpu

ALPHA = 0.1
INV_ALPHA = 1.0 / ALPHA


def _round_up(x, m):
    return (x + m - 1) // m * m


def _default_elementwise_dtype(compute_dtype):
    """bf16 elementwise only where the VPU/EUP are bf16-native (v6e/v7x)."""
    if jnp.dtype(compute_dtype) != jnp.dtype(jnp.bfloat16):
        return jnp.float32
    try:
        kind = jax.devices()[0].device_kind.lower()
    except Exception:
        return jnp.float32
    if ("v6" in kind) or ("v7" in kind) or ("7x" in kind):
        return jnp.bfloat16
    return jnp.float32


def ensemble_kernel(x_ref, w1_ref, b1_ref, w2_ref, out_ref):
    # x_ref:  (tn, D)   input features (compute dtype: bf16 or f32)
    # w1_ref: (D, KH)   concatenated first-layer weights (compute dtype)
    # b1_ref: (1, KH)   concatenated first-layer biases (elementwise dtype)
    # w2_ref: (1, KH)   concatenated second-layer weights, 1/K folded in (f32)
    # out_ref:(1, tn)   per-atom ensemble-average energy, lane-dense (f32)
    z = jnp.dot(x_ref[...], w1_ref[...], preferred_element_type=jnp.float32)
    z = z.astype(b1_ref.dtype) + b1_ref[...]
    # CELU with the "-1" and the trailing alpha*w2 scale folded out of the kernel:
    #   CELU(z) = [max(z,0) + alpha*exp(min(z,0)/alpha)] - alpha
    t = jnp.maximum(z, 0) + ALPHA * jnp.exp(jnp.minimum(z, 0) * INV_ALPHA)
    contrib = t * w2_ref[...]                     # promotes to f32 (w2 is f32)
    out_ref[0, :] = jnp.sum(contrib, axis=-1).astype(out_ref.dtype)


def prepare_ensemble_params(w1, b1, w2, b2, *, compute_dtype=jnp.bfloat16,
                            elementwise_dtype=None):
    """Hoisted once-per-model prep: concatenate member weights along hidden axis.

    w1:(K,D,H), b1:(K,1,H), w2:(K,H,1), b2:(K,1,1)."""
    K, D, H = w1.shape
    KH = K * H
    if elementwise_dtype is None:
        elementwise_dtype = _default_elementwise_dtype(compute_dtype)
    w1cat = jnp.transpose(w1, (1, 0, 2)).reshape(D, KH).astype(compute_dtype)
    b1cat = b1.reshape(1, KH).astype(elementwise_dtype)
    w2row = (w2.reshape(1, KH).astype(jnp.float32) * (1.0 / K))   # 1/K folded in
    # Per-atom constant: mean(b2) plus the folded-out CELU "-alpha" term.
    const_per_atom = (jnp.mean(b2.astype(jnp.float32))
                      - ALPHA * jnp.sum(w2row)).astype(jnp.float32)
    return dict(w1cat=w1cat, b1cat=b1cat, w2row=w2row,
                const_per_atom=const_per_atom)


def ensemble_apply(species, aev, params, *, tile_n=1024):
    M, A, D = aev.shape
    N = M * A
    w1cat, b1cat, w2row = params["w1cat"], params["b1cat"], params["w2row"]
    KH = w1cat.shape[1]
    assert w1cat.shape[0] == D
    compute_dtype = w1cat.dtype

    x = aev.reshape(N, D).astype(compute_dtype)

    # Lane-dense output blocks need tn % 128 == 0; aim for >= 2 grid tiles when
    # there is enough work so v7x's second TensorCore is not idled.
    tile_n = _round_up(max(int(tile_n), 128), 128)
    tn = max(128, min(tile_n, _round_up(-(-N // 2), 128)))
    n_pad = _round_up(N, tn)
    if n_pad != N:
        x = jnp.pad(x, ((0, n_pad - N), (0, 0)))   # zero rows -> finite, sliced off
    num_tiles = n_pad // tn

    # Explicit VMEM budget: 2x pipelined x tile + weights + h temporaries.
    cd_size = jnp.dtype(compute_dtype).itemsize
    ew_size = jnp.dtype(b1cat.dtype).itemsize
    vmem_need = (2 * tn * D * cd_size            # double-buffered x tile
                 + 2 * D * KH * cd_size          # W1cat (worst case: double buffered)
                 + 2 * KH * (ew_size + 4)        # b1cat + w2row
                 + 2 * tn * 4                    # output tile
                 + 3 * tn * KH * 4)              # z / t / contrib temporaries
    vmem_limit = int(min(max(int(1.5 * vmem_need) + (4 << 20), 32 << 20), 56 << 20))

    x_spec = pl.BlockSpec((tn, D), lambda i: (i, 0))
    out_spec = pl.BlockSpec((1, tn), lambda i: (0, i))
    cparams = pltpu.CompilerParams(dimension_semantics=("parallel",),
                                   vmem_limit_bytes=vmem_limit)

    def _call(single_buffer_weights):
        kw = dict(pipeline_mode=pl.Buffered(1)) if single_buffer_weights else {}
        in_specs = [
            x_spec,                                              # pipelined over N
            pl.BlockSpec((D, KH), lambda i: (0, 0), **kw),       # W1cat, resident
            pl.BlockSpec((1, KH), lambda i: (0, 0), **kw),       # b1cat, resident
            pl.BlockSpec((1, KH), lambda i: (0, 0), **kw),       # w2row, resident
        ]
        return pl.pallas_call(
            ensemble_kernel,
            out_shape=jax.ShapeDtypeStruct((1, n_pad), jnp.float32),
            grid=(num_tiles,),
            in_specs=in_specs,
            out_specs=out_spec,
            compiler_params=cparams,
        )(x, w1cat, b1cat, w2row)

    try:
        per_atom = _call(True)           # single-buffer grid-invariant weights
    except Exception:
        per_atom = _call(False)          # fallback: default double buffering

    # Glue: per-molecule sum over atoms (linear, so exact after averaging) plus
    # the folded per-atom constant (mean b2 and the CELU "-alpha" term).
    per_atom = per_atom[0, :N].reshape(M, A)
    energies = per_atom.sum(axis=1) + A * params["const_per_atom"]
    return species, energies


def ensemble_forward(species, aev, w1, b1, w2, b2, *, compute_dtype=jnp.bfloat16,
                     elementwise_dtype=None, tile_n=1024):
    params = prepare_ensemble_params(w1, b1, w2, b2, compute_dtype=compute_dtype,
                                     elementwise_dtype=elementwise_dtype)
    return ensemble_apply(species, aev, params, tile_n=tile_n)


def ensemble_reference(species, aev, w1, b1, w2, b2):
    M, A, D = aev.shape
    K = w1.shape[0]
    x = aev.reshape(M * A, D).astype(jnp.float32)
    total = 0.0
    for k in range(K):
        pre = jnp.dot(x, w1[k], precision=jax.lax.Precision.HIGHEST) + b1[k]
        h = jnp.maximum(pre, 0.0) + ALPHA * (
            jnp.exp(jnp.minimum(pre, 0.0) * INV_ALPHA) - 1.0)
        e = (jnp.dot(h, w2[k], precision=jax.lax.Precision.HIGHEST)
             + b2[k]).reshape(M, A).sum(axis=1)
        total = total + e
    return species, total / K


if __name__ == "__main__":
    # Small shapes: K=4 ensemble members, M=2 molecules, A=8 atoms,
    # D=128 AEV features, H=64 hidden units.
    K, M, A, D, H = 4, 2, 8, 128, 64

    key = jax.random.PRNGKey(0)
    k_aev, k_sp, k_w1, k_b1, k_w2, k_b2 = jax.random.split(key, 6)

    aev = jax.random.normal(k_aev, (M, A, D), dtype=jnp.float32)
    species = jax.random.randint(k_sp, (M, A), 0, 4, dtype=jnp.int32)

    w1 = jax.random.normal(k_w1, (K, D, H), dtype=jnp.float32) * (1.0 / jnp.sqrt(D))
    b1 = jax.random.normal(k_b1, (K, 1, H), dtype=jnp.float32) * 0.01
    w2 = jax.random.normal(k_w2, (K, H, 1), dtype=jnp.float32) * (1.0 / jnp.sqrt(H))
    b2 = jax.random.normal(k_b2, (K, 1, 1), dtype=jnp.float32) * 0.01

    sp_ref, e_ref = ensemble_reference(species, aev, w1, b1, w2, b2)

    # Exact-semantics f32 path.
    sp_out, e_f32 = ensemble_forward(species, aev, w1, b1, w2, b2,
                                     compute_dtype=jnp.float32)
    jax.block_until_ready(e_f32)
    assert sp_out.shape == species.shape and sp_out.dtype == species.dtype
    assert jnp.array_equal(sp_out, sp_ref)
    assert e_f32.shape == (M,)
    assert jnp.allclose(e_f32, e_ref, atol=2e-3, rtol=2e-3), (e_f32, e_ref)

    # Default path: bf16 MXU feed (+ bf16 elementwise on v6e/v7x), f32 accumulation.
    _, e_bf16 = ensemble_forward(species, aev, w1, b1, w2, b2)
    jax.block_until_ready(e_bf16)
    assert jnp.allclose(e_bf16, e_ref, atol=7.5e-2, rtol=5e-2), (e_bf16, e_ref)

    print("KERNEL_OK")
</pallas_src>

<mosaic_0001>
module attributes {stable_mosaic.version = 11 : i64} {
  func.func @ensemble_kernel(%arg0: i32, %arg1: memref<128x128xf32, #tpu.memory_space<vmem>>, %arg2: memref<128x256xf32, #tpu.memory_space<vmem>>, %arg3: memref<1x256xf32, #tpu.memory_space<vmem>>, %arg4: memref<1x256xf32, #tpu.memory_space<vmem>>, %arg5: memref<1x128xf32, #tpu.memory_space<vmem>>) attributes {dimension_semantics = [#tpu.dimension_semantics<parallel>], iteration_bounds = array<i64: 1>, scalar_prefetch = 0 : i64, scratch_operands = 0 : i64, tpu.core_type = #tpu.core_type<tc>, window_params = [{transform_indices = @transform_0, window_bounds = array<i64: 128, 128>}, {pipeline_mode = #tpu.pipeline_mode<synchronous>, transform_indices = @transform_1, window_bounds = array<i64: 128, 256>}, {pipeline_mode = #tpu.pipeline_mode<synchronous>, transform_indices = @transform_2, window_bounds = array<i64: 1, 256>}, {pipeline_mode = #tpu.pipeline_mode<synchronous>, transform_indices = @transform_3, window_bounds = array<i64: 1, 256>}, {transform_indices = @transform_4, window_bounds = array<i64: 1, 128>}]} {
    %c0 = arith.constant 0 : index
    %c0_0 = arith.constant 0 : index
    %0 = vector.load %arg1[%c0, %c0_0] : memref<128x128xf32, #tpu.memory_space<vmem>>, vector<128x128xf32>
    %c0_1 = arith.constant 0 : index
    %c0_2 = arith.constant 0 : index
    %1 = vector.load %arg2[%c0_1, %c0_2] : memref<128x256xf32, #tpu.memory_space<vmem>>, vector<128x256xf32>
    %cst = arith.constant dense<0.000000e+00> : vector<128x256xf32>
    %2 = tpu.matmul %0, %1, %cst {dimension_numbers = #tpu.dot_dimension_numbers<[1], [0], [0], [1], [0, 0, 1, 1], [], []>} : vector<128x128xf32>, vector<128x256xf32>, vector<128x256xf32> -> vector<128x256xf32>
    %c0_3 = arith.constant 0 : index
    %c0_4 = arith.constant 0 : index
    %3 = vector.load %arg3[%c0_3, %c0_4] : memref<1x256xf32, #tpu.memory_space<vmem>>, vector<1x256xf32>
    %4 = vector.broadcast %3 : vector<1x256xf32> to vector<128x256xf32>
    %5 = arith.addf %2, %4 : vector<128x256xf32>
    %cst_5 = arith.constant 0.000000e+00 : f32
    %6 = vector.broadcast %cst_5 : f32 to vector<128x256xf32>
    %7 = arith.maximumf %5, %6 : vector<128x256xf32>
    %cst_6 = arith.constant 0.000000e+00 : f32
    %8 = vector.broadcast %cst_6 : f32 to vector<128x256xf32>
    %9 = arith.minimumf %5, %8 : vector<128x256xf32>
    %cst_7 = arith.constant 1.000000e+01 : f32
    %10 = vector.broadcast %cst_7 : f32 to vector<128x256xf32>
    %11 = arith.mulf %9, %10 : vector<128x256xf32>
    %12 = math.exp %11 : vector<128x256xf32>
    %cst_8 = arith.constant 1.000000e-01 : f32
    %13 = vector.broadcast %cst_8 : f32 to vector<128x256xf32>
    %14 = arith.mulf %13, %12 : vector<128x256xf32>
    %15 = arith.addf %7, %14 : vector<128x256xf32>
    %c0_9 = arith.constant 0 : index
    %c0_10 = arith.constant 0 : index
    %16 = vector.load %arg4[%c0_9, %c0_10] : memref<1x256xf32, #tpu.memory_space<vmem>>, vector<1x256xf32>
    %17 = vector.broadcast %16 : vector<1x256xf32> to vector<128x256xf32>
    %18 = arith.mulf %15, %17 : vector<128x256xf32>
    %cst_11 = arith.constant dense<0.000000e+00> : vector<128xf32>
    %19 = vector.multi_reduction <add>, %18, %cst_11 [1] : vector<128x256xf32> to vector<128xf32>
    %c0_12 = arith.constant 0 : index
    %c0_13 = arith.constant 0 : index
    %20 = vector.load %arg5[%c0_12, %c0_13] : memref<1x128xf32, #tpu.memory_space<vmem>>, vector<1x128xf32>
    %21 = vector.shape_cast %20 : vector<1x128xf32> to vector<128xf32>
    %22 = vector.shape_cast %19 : vector<128xf32> to vector<1x128xf32>
    tpu.vector_store %arg5[%c0_12, %c0_13], %22 {strides = array<i32>} : memref<1x128xf32, #tpu.memory_space<vmem>>, vector<1x128xf32>,
    return
  }
  func.func @transform_0(%arg0: i32) -> (i32, i32) {
    %c0_i32 = arith.constant 0 : i32
    %c0_i32_0 = arith.constant 0 : i32
    return %arg0, %c0_i32 : i32, i32
  }
  func.func @transform_1(%arg0: i32) -> (i32, i32) {
    %c0_i32 = arith.constant 0 : i32
    %c0_i32_0 = arith.constant 0 : i32
    %c0_i32_1 = arith.constant 0 : i32
    return %c0_i32, %c0_i32_0 : i32, i32
  }
  func.func @transform_2(%arg0: i32) -> (i32, i32) {
    %c0_i32 = arith.constant 0 : i32
    %c0_i32_0 = arith.constant 0 : i32
    %c0_i32_1 = arith.constant 0 : i32
    return %c0_i32, %c0_i32_0 : i32, i32
  }
  func.func @transform_3(%arg0: i32) -> (i32, i32) {
    %c0_i32 = arith.constant 0 : i32
    %c0_i32_0 = arith.constant 0 : i32
    %c0_i32_1 = arith.constant 0 : i32
    return %c0_i32, %c0_i32_0 : i32, i32
  }
  func.func @transform_4(%arg0: i32) -> (i32, i32) {
    %c0_i32 = arith.constant 0 : i32
    %c0_i32_0 = arith.constant 0 : i32
    return %c0_i32, %arg0 : i32, i32
  }
}

module attributes {stable_mosaic.version = 11 : i64} {
  func.func @ensemble_kernel(%arg0: i32, %arg1: memref<128x128xf32, #tpu.memory_space<vmem>>, %arg2: memref<128x256xf32, #tpu.memory_space<vmem>>, %arg3: memref<1x256xf32, #tpu.memory_space<vmem>>, %arg4: memref<1x256xf32, #tpu.memory_space<vmem>>, %arg5: memref<1x128xf32, #tpu.memory_space<vmem>>) attributes {dimension_semantics = [#tpu.dimension_semantics<parallel>], iteration_bounds = array<i64: 1>, scalar_prefetch = 0 : i64, scratch_operands = 0 : i64, tpu.core_type = #tpu.core_type<tc>, window_params = [{transform_indices = @transform_0, window_bounds = array<i64: 128, 128>}, {pipeline_mode = #tpu.pipeline_mode<synchronous>, transform_indices = @transform_1, window_bounds = array<i64: 128, 256>}, {pipeline_mode = #tpu.pipeline_mode<synchronous>, transform_indices = @transform_2, window_bounds = array<i64: 1, 256>}, {pipeline_mode = #tpu.pipeline_mode<synchronous>, transform_indices = @transform_3, window_bounds = array<i64: 1, 256>}, {transform_indices = @transform_4, window_bounds = array<i64: 1, 128>}]} {
    %c0 = arith.constant 0 : index
    %c0_0 = arith.constant 0 : index
    %0 = vector.load %arg1[%c0, %c0_0] : memref<128x128xf32, #tpu.memory_space<vmem>>, vector<128x128xf32>
    %c0_1 = arith.constant 0 : index
    %c0_2 = arith.constant 0 : index
    %1 = vector.load %arg2[%c0_1, %c0_2] : memref<128x256xf32, #tpu.memory_space<vmem>>, vector<128x256xf32>
    %cst = arith.constant dense<0.000000e+00> : vector<128x256xf32>
    %2 = tpu.matmul %0, %1, %cst {dimension_numbers = #tpu.dot_dimension_numbers<[1], [0], [0], [1], [0, 0, 1, 1], [], []>} : vector<128x128xf32>, vector<128x256xf32>, vector<128x256xf32> -> vector<128x256xf32>
    %c0_3 = arith.constant 0 : index
    %c0_4 = arith.constant 0 : index
    %3 = vector.load %arg3[%c0_3, %c0_4] : memref<1x256xf32, #tpu.memory_space<vmem>>, vector<1x256xf32>
    %4 = vector.broadcast %3 : vector<1x256xf32> to vector<128x256xf32>
    %5 = arith.addf %2, %4 : vector<128x256xf32>
    %cst_5 = arith.constant 0.000000e+00 : f32
    %6 = vector.broadcast %cst_5 : f32 to vector<128x256xf32>
    %7 = arith.maximumf %5, %6 : vector<128x256xf32>
    %cst_6 = arith.constant 0.000000e+00 : f32
    %8 = vector.broadcast %cst_6 : f32 to vector<128x256xf32>
    %9 = arith.minimumf %5, %8 : vector<128x256xf32>
    %cst_7 = arith.constant 1.000000e+01 : f32
    %10 = vector.broadcast %cst_7 : f32 to vector<128x256xf32>
    %11 = arith.mulf %9, %10 : vector<128x256xf32>
    %12 = math.exp %11 : vector<128x256xf32>
    %cst_8 = arith.constant 1.000000e-01 : f32
    %13 = vector.broadcast %cst_8 : f32 to vector<128x256xf32>
    %14 = arith.mulf %13, %12 : vector<128x256xf32>
    %15 = arith.addf %7, %14 : vector<128x256xf32>
    %c0_9 = arith.constant 0 : index
    %c0_10 = arith.constant 0 : index
    %16 = vector.load %arg4[%c0_9, %c0_10] : memref<1x256xf32, #tpu.memory_space<vmem>>, vector<1x256xf32>
    %17 = vector.broadcast %16 : vector<1x256xf32> to vector<128x256xf32>
    %18 = arith.mulf %15, %17 : vector<128x256xf32>
    %cst_11 = arith.constant dense<0.000000e+00> : vector<128xf32>
    %19 = vector.multi_reduction <add>, %18, %cst_11 [1] : vector<128x256xf32> to vector<128xf32>
    %c0_12 = arith.constant 0 : index
    %c0_13 = arith.constant 0 : index
    %20 = vector.load %arg5[%c0_12, %c0_13] : memref<1x128xf32, #tpu.memory_space<vmem>>, vector<1x128xf32>
    %21 = vector.shape_cast %20 : vector<1x128xf32> to vector<128xf32>
    %22 = vector.shape_cast %19 : vector<128xf32> to vector<1x128xf32>
    tpu.vector_store %arg5[%c0_12, %c0_13], %22 {strides = array<i32>} : memref<1x128xf32, #tpu.memory_space<vmem>>, vector<1x128xf32>,
    return
  }
  func.func @transform_0(%arg0: i32) -> (i32, i32) {
    %c0_i32 = arith.constant 0 : i32
    %c0_i32_0 = arith.constant 0 : i32
    return %arg0, %c0_i32 : i32, i32
  }
  func.func @transform_1(%arg0: i32) -> (i32, i32) {
    %c0_i32 = arith.constant 0 : i32
    %c0_i32_0 = arith.constant 0 : i32
    %c0_i32_1 = arith.constant 0 : i32
    return %c0_i32, %c0_i32_0 : i32, i32
  }
  func.func @transform_2(%arg0: i32) -> (i32, i32) {
    %c0_i32 = arith.constant 0 : i32
    %c0_i32_0 = arith.constant 0 : i32
    %c0_i32_1 = arith.constant 0 : i32
    return %c0_i32, %c0_i32_0 : i32, i32
  }
  func.func @transform_3(%arg0: i32) -> (i32, i32) {
    %c0_i32 = arith.constant 0 : i32
    %c0_i32_0 = arith.constant 0 : i32
    %c0_i32_1 = arith.constant 0 : i32
    return %c0_i32, %c0_i32_0 : i32, i32
  }
  func.func @transform_4(%arg0: i32) -> (i32, i32) {
    %c0_i32 = arith.constant 0 : i32
    %c0_i32_0 = arith.constant 0 : i32
    return %c0_i32, %arg0 : i32, i32
  }
}

</mosaic_0001>

<llo_original>
// kernel: tpu_custom_call.1
$region0: #{tpu_custom_call.1}
  #allocation0 [shape = 'u32[]', space=smem, size = 0x4, offset = 0x4, fixed_abs, tag = 'smem constant byte address 0x4 - core index']
  #allocation1 [shape = 'u32[144,128]{1,0:T(1,128)}', space=vmem, size = 0x12000, scoped, tag = 'internal scratch']
  %s0 = inlined_call_operand.hbm [shape: f32[128,128], index: 0, kind: input, shape index: {}]
  %s1 = inlined_call_operand.hbm [shape: f32[128,256], index: 1, kind: input, shape index: {}]
  %s2 = inlined_call_operand.vmem [shape: f32[1,256], index: 2, kind: input, shape index: {}]
  %s3 = inlined_call_operand.vmem [shape: f32[1,256], index: 3, kind: input, shape index: {}]
  %s4 = inlined_call_operand.hbm [shape: f32[1,128], index: 4, kind: output, shape index: {}]
  %s5 = sld [smem:[#allocation0]]
  $region34: #{tpu_custom_call.1} parent=0
    _
  %s7 = ssub.s32 1, %s5
  %s8 = scalar_select 0, %s7, %s5
  $region1: #{tpu_custom_call.1} parent=0
    #allocation2 [shape = 'u8[65536]{0}', space=vmem, size = 0x10000, scoped, tag = 'input window, operand 0, single buffered']
    #allocation3 [shape = 's32[1]{0}', space=sflag, size = 0x4, scoped, tag = 'scoped memory for tpu_custom_call.1']
    #allocation4 [shape = 's32[1]{0}', space=sflag, size = 0x4, scoped, tag = 'scoped memory for tpu_custom_call.1']
    #allocation5 [shape = 'u8[131072]{0}', space=vmem, size = 0x20000, scoped, tag = 'input window, operand 1, single buffered']
    #allocation6 [shape = 's32[1]{0}', space=sflag, size = 0x4, scoped, tag = 'scoped memory for tpu_custom_call.1']
    #allocation7 [shape = 'u8[512]{0}', space=vmem, size = 0x400, scoped, tag = 'output window, operand 0, single buffered']
    %9 = vsyncpa [#allocation3], 0
    %10 = vsyncpa [#allocation6], 0
    %11 = vsyncpa [#allocation4], 0
    // Predicated region
    $region2: #{tpu_custom_call.1} parent=1 // pred_check
      _
    $region3: #{tpu_custom_call.1} parent=1 // pred_check_branch
      %13 = sbr.rel (0) target = $region5
    $region4: #{tpu_custom_call.1} parent=1 // pred_region
      %s15 = ssub.s32 2048, 2048
      %16 = vsyncadd [#allocation3], %s15
      %s17 = sshll.u32 [#allocation2], 4
      %s18 = int_to_ptr.vmem [resolvable:$true] %s17
      %23 = dma.hbm_to_vmem [thread:$0]  %s0, 2048, %s18, [#allocation3], 128, 128, 8
    $region5: #{tpu_custom_call.1} parent=1 // pred_fallthru
      _
    // Predicated region
    $region6: #{tpu_custom_call.1} parent=1 // pred_check
      _
    $region7: #{tpu_custom_call.1} parent=1 // pred_check_branch
      %25 = sbr.rel (0) target = $region9
    $region8: #{tpu_custom_call.1} parent=1 // pred_region
      %s27 = ssub.s32 4096, 4096
      %28 = vsyncadd [#allocation6], %s27
      %s29 = sshll.u32 [#allocation5], 4
      %s30 = int_to_ptr.vmem [resolvable:$true] %s29
      %35 = dma.hbm_to_vmem [thread:$0]  %s1, 4096, %s30, [#allocation6], 256, 256, 16
    $region9: #{tpu_custom_call.1} parent=1 // pred_fallthru
      _
    // Predicated region
    $region10: #{tpu_custom_call.1} parent=1 // pred_check
      _
    $region11: #{tpu_custom_call.1} parent=1 // pred_check_branch
      %37 = sbr.rel (0) target = $region13
    $region12: #{tpu_custom_call.1} parent=1 // pred_region
      _
    $region13: #{tpu_custom_call.1} parent=1 // pred_fallthru
      _
    // Predicated region
    $region14: #{tpu_custom_call.1} parent=1 // pred_check
      _
    $region15: #{tpu_custom_call.1} parent=1 // pred_check_branch
      %39 = sbr.rel (0) target = $region17
    $region16: #{tpu_custom_call.1} parent=1 // pred_region
      _
    $region17: #{tpu_custom_call.1} parent=1 // pred_fallthru
      _
    // Predicated region
    $region18: #{tpu_custom_call.1} parent=1 // pred_check
      _
    $region19: #{tpu_custom_call.1} parent=1 // pred_check_branch
      %41 = sbr.rel (0) target = $region21
    $region20: #{tpu_custom_call.1} parent=1 // pred_region
      %42 = dma.done [#allocation3], 2048
    $region21: #{tpu_custom_call.1} parent=1 // pred_fallthru
      _
    // Predicated region
    $region22: #{tpu_custom_call.1} parent=1 // pred_check
      _
    $region23: #{tpu_custom_call.1} parent=1 // pred_check_branch
      %44 = sbr.rel (0) target = $region25
    $region24: #{tpu_custom_call.1} parent=1 // pred_region
      %45 = dma.done [#allocation6], 4096
    $region25: #{tpu_custom_call.1} parent=1 // pred_fallthru
      _
    %v46 = vld [vmem:[#allocation2] sm:$0xff]
    %v47 = vld [vmem:[#allocation2 + $0x8] sm:$0xff]
    %v48 = vld [vmem:[#allocation2 + $0x10] sm:$0xff]
    %v49 = vld [vmem:[#allocation2 + $0x18] sm:$0xff]
    %v50 = vld [vmem:[#allocation2 + $0x20] sm:$0xff]
    %v51 = vld [vmem:[#allocation2 + $0x28] sm:$0xff]
    %v52 = vld [vmem:[#allocation2 + $0x30] sm:$0xff]
    %v53 = vld [vmem:[#allocation2 + $0x38] sm:$0xff]
    %v54 = vld [vmem:[#allocation2 + $0x40] sm:$0xff]
    %v55 = vld [vmem:[#allocation2 + $0x48] sm:$0xff]
    %v56 = vld [vmem:[#allocation2 + $0x50] sm:$0xff]
    %v57 = vld [vmem:[#allocation2 + $0x58] sm:$0xff]
    %v58 = vld [vmem:[#allocation2 + $0x60] sm:$0xff]
    %v59 = vld [vmem:[#allocation2 + $0x68] sm:$0xff]
    %v60 = vld [vmem:[#allocation2 + $0x70] sm:$0xff]
    %v61 = vld [vmem:[#allocation2 + $0x78] sm:$0xff]
    %v62 = vld [vmem:[#allocation5] sm:$0xff]
    %v63 = vld [vmem:[#allocation5 + $0x8] sm:$0xff]
    %v64 = vld [vmem:[#allocation5 + $0x10] sm:$0xff]
    %v65 = vld [vmem:[#allocation5 + $0x18] sm:$0xff]
    %v66 = vld [vmem:[#allocation5 + $0x20] sm:$0xff]
    %v67 = vld [vmem:[#allocation5 + $0x28] sm:$0xff]
    %v68 = vld [vmem:[#allocation5 + $0x30] sm:$0xff]
    %v69 = vld [vmem:[#allocation5 + $0x38] sm:$0xff]
    %v70 = vld [vmem:[#allocation5 + $0x40] sm:$0xff]
    %v71 = vld [vmem:[#allocation5 + $0x48] sm:$0xff]
    %v72 = vld [vmem:[#allocation5 + $0x50] sm:$0xff]
    %v73 = vld [vmem:[#allocation5 + $0x58] sm:$0xff]
    %v74 = vld [vmem:[#allocation5 + $0x60] sm:$0xff]
    %v75 = vld [vmem:[#allocation5 + $0x68] sm:$0xff]
    %v76 = vld [vmem:[#allocation5 + $0x70] sm:$0xff]
    %v77 = vld [vmem:[#allocation5 + $0x78] sm:$0xff]
    %v78 = vld [vmem:[#allocation5 + $0x80] sm:$0xff]
    %v79 = vld [vmem:[#allocation5 + $0x88] sm:$0xff]
    %v80 = vld [vmem:[#allocation5 + $0x90] sm:$0xff]
    %v81 = vld [vmem:[#allocation5 + $0x98] sm:$0xff]
    %v82 = vld [vmem:[#allocation5 + $0xa0] sm:$0xff]
    %v83 = vld [vmem:[#allocation5 + $0xa8] sm:$0xff]
    %v84 = vld [vmem:[#allocation5 + $0xb0] sm:$0xff]
    %v85 = vld [vmem:[#allocation5 + $0xb8] sm:$0xff]
    %v86 = vld [vmem:[#allocation5 + $0xc0] sm:$0xff]
    %v87 = vld [vmem:[#allocation5 + $0xc8] sm:$0xff]
    %v88 = vld [vmem:[#allocation5 + $0xd0] sm:$0xff]
    %v89 = vld [vmem:[#allocation5 + $0xd8] sm:$0xff]
    %v90 = vld [vmem:[#allocation5 + $0xe0] sm:$0xff]
    %v91 = vld [vmem:[#allocation5 + $0xe8] sm:$0xff]
    %v92 = vld [vmem:[#allocation5 + $0xf0] sm:$0xff]
    %v93 = vld [vmem:[#allocation5 + $0xf8] sm:$0xff]
    %v94 = vld [vmem:[%s2] sm:$0x3]
    %v96 = vlaneseq
    %v97 = vshrl.u32 %v96, 7
    %v98 = vsub.s32 0, %v97
    %v99 = vrot.slane %v94, %v98
    %v100 = vlaneseq
    %v101 = vshrl.u32 %v100, 7
    %v102 = vsub.s32 1, %v101
    %v103 = vrot.slane %v94, %v102
    %106 = vmatprep.subr.mxu0 %v93
    %107 = vmatpush1.msra.mxu0 %v92
    %108 = vmatprep.subr.mxu0 %v91
    %109 = vmatpush1.msra.mxu0 %v90
    %110 = vmatprep.subr.mxu0 %v89
    %111 = vmatpush1.msra.mxu0 %v88
    %112 = vmatprep.subr.mxu0 %v87
    %113 = vmatpush1.msra.mxu0 %v86
    %114 = vmatprep.subr.mxu0 %v85
    %115 = vmatpush1.msra.mxu0 %v84
    %116 = vmatprep.subr.mxu0 %v83
    %117 = vmatpush1.msra.mxu0 %v82
    %118 = vmatprep.subr.mxu0 %v81
    %119 = vmatpush1.msra.mxu0 %v80
    %120 = vmatprep.subr.mxu0 %v79
    %121 = vmatpush1.msra.mxu0 %v78
    %122 = vmatprep.subr.mxu0 %v77
    %123 = vmatpush1.msra.mxu0 %v76
    %124 = vmatprep.subr.mxu0 %v75
    %125 = vmatpush1.msra.mxu0 %v74
    %126 = vmatprep.subr.mxu0 %v73
    %127 = vmatpush1.msra.mxu0 %v72
    %128 = vmatprep.subr.mxu0 %v71
    %129 = vmatpush1.msra.mxu0 %v70
    %130 = vmatprep.subr.mxu0 %v69
    %131 = vmatpush1.msra.mxu0 %v68
    %132 = vmatprep.subr.mxu0 %v67
    %133 = vmatpush1.msra.mxu0 %v66
    %134 = vmatprep.subr.mxu0 %v65
    %135 = vmatpush1.msra.mxu0 %v64
    %136 = vmatprep.subr.mxu0 %v63
    %137 = vmatpush1.msra.mxu0 %v62
    %138 = vmatprep.subr.mxu0 0.0
    %139 = vmatpush2.msra.mxu0 0.0
    %140 = vmatprep.subr.mxu0 0.0
    %141 = vmatpush2.msra.mxu0 0.0
    %142 = vmatprep.subr.mxu0 0.0
    %143 = vmatpush2.msra.mxu0 0.0
    %144 = vmatprep.subr.mxu0 0.0
    %145 = vmatpush2.msra.mxu0 0.0
    %146 = vmatprep.subr.mxu0 0.0
    %147 = vmatpush2.msra.mxu0 0.0
    %148 = vmatprep.subr.mxu0 0.0
    %149 = vmatpush2.msra.mxu0 0.0
    %150 = vmatprep.subr.mxu0 0.0
    %151 = vmatpush2.msra.mxu0 0.0
    %152 = vmatprep.subr.mxu0 0.0
    %153 = vmatpush2.msra.mxu0 0.0
    %154 = vmatprep.subr.mxu0 0.0
    %155 = vmatpush2.msra.mxu0 0.0
    %156 = vmatprep.subr.mxu0 0.0
    %157 = vmatpush2.msra.mxu0 0.0
    %158 = vmatprep.subr.mxu0 0.0
    %159 = vmatpush2.msra.mxu0 0.0
    %160 = vmatprep.subr.mxu0 0.0
    %161 = vmatpush2.msra.mxu0 0.0
    %162 = vmatprep.subr.mxu0 0.0
    %163 = vmatpush2.msra.mxu0 0.0
    %164 = vmatprep.subr.mxu0 0.0
    %165 = vmatpush2.msra.mxu0 0.0
    %166 = vmatprep.subr.mxu0 0.0
    %167 = vmatpush2.msra.mxu0 0.0
    %168 = vmatprep.subr.mxu0 0.0
    %169 = vmatpush2.msra.mxu0 0.0
    %170 = vmatprep.mubr.f32.mxu0 0.0
    %171 = vmatmul.mubr.f32.gmra.mxu0 %v46
    %v172 = vpop.f32.mrf.mxu0
    %v173 = vadd.f32 %v99, %v172
    %v174 = vpop.f32.mrf.mxu0
    %v175 = vadd.f32 %v103, %v174
    %176 = vmatprep.mubr.f32.mxu0 0.0
    %177 = vmatmul.mubr.f32.gmra.mxu0 %v47
    %v178 = vpop.f32.mrf.mxu0
    %v179 = vadd.f32 %v99, %v178
    %v180 = vpop.f32.mrf.mxu0
    %v181 = vadd.f32 %v103, %v180
    %182 = vmatprep.mubr.f32.mxu0 0.0
    %183 = vmatmul.mubr.f32.gmra.mxu0 %v48
    %v184 = vpop.f32.mrf.mxu0
    %v185 = vadd.f32 %v99, %v184
    %v186 = vpop.f32.mrf.mxu0
    %v187 = vadd.f32 %v103, %v186
    %188 = vmatprep.mubr.f32.mxu0 0.0
    %189 = vmatmul.mubr.f32.gmra.mxu0 %v49
    %v190 = vpop.f32.mrf.mxu0
    %v191 = vadd.f32 %v99, %v190
    %v192 = vpop.f32.mrf.mxu0
    %v193 = vadd.f32 %v103, %v192
    %194 = vmatprep.mubr.f32.mxu0 0.0
    %195 = vmatmul.mubr.f32.gmra.mxu0 %v50
    %v196 = vpop.f32.mrf.mxu0
    %v197 = vadd.f32 %v99, %v196
    %v198 = vpop.f32.mrf.mxu0
    %v199 = vadd.f32 %v103, %v198
    %200 = vmatprep.mubr.f32.mxu0 0.0
    %201 = vmatmul.mubr.f32.gmra.mxu0 %v51
    %v202 = vpop.f32.mrf.mxu0
    %v203 = vadd.f32 %v99, %v202
    %v204 = vpop.f32.mrf.mxu0
    %v205 = vadd.f32 %v103, %v204
    %206 = vmatprep.mubr.f32.mxu0 0.0
    %207 = vmatmul.mubr.f32.gmra.mxu0 %v52
    %v208 = vpop.f32.mrf.mxu0
    %v209 = vadd.f32 %v99, %v208
    %v210 = vpop.f32.mrf.mxu0
    %v211 = vadd.f32 %v103, %v210
    %212 = vmatprep.mubr.f32.mxu0 0.0
    %213 = vmatmul.mubr.f32.gmra.mxu0 %v53
    %v214 = vpop.f32.mrf.mxu0
    %v215 = vadd.f32 %v99, %v214
    %v216 = vpop.f32.mrf.mxu0
    %v217 = vadd.f32 %v103, %v216
    %218 = vmatprep.mubr.f32.mxu0 0.0
    %219 = vmatmul.mubr.f32.gmra.mxu0 %v54
    %v220 = vpop.f32.mrf.mxu0
    %v221 = vadd.f32 %v99, %v220
    %v222 = vpop.f32.mrf.mxu0
    %v223 = vadd.f32 %v103, %v222
    %224 = vmatprep.mubr.f32.mxu0 0.0
    %225 = vmatmul.mubr.f32.gmra.mxu0 %v55
    %v226 = vpop.f32.mrf.mxu0
    %v227 = vadd.f32 %v99, %v226
    %v228 = vpop.f32.mrf.mxu0
    %v229 = vadd.f32 %v103, %v228
    %230 = vmatprep.mubr.f32.mxu0 0.0
    %231 = vmatmul.mubr.f32.gmra.mxu0 %v56
    %v232 = vpop.f32.mrf.mxu0
    %v233 = vadd.f32 %v99, %v232
    %v234 = vpop.f32.mrf.mxu0
    %v235 = vadd.f32 %v103, %v234
    %236 = vmatprep.mubr.f32.mxu0 0.0
    %237 = vmatmul.mubr.f32.gmra.mxu0 %v57
    %v238 = vpop.f32.mrf.mxu0
    %v239 = vadd.f32 %v99, %v238
    %v240 = vpop.f32.mrf.mxu0
    %v241 = vadd.f32 %v103, %v240
    %242 = vmatprep.mubr.f32.mxu0 0.0
    %243 = vmatmul.mubr.f32.gmra.mxu0 %v58
    %v244 = vpop.f32.mrf.mxu0
    %v245 = vadd.f32 %v99, %v244
    %v246 = vpop.f32.mrf.mxu0
    %v247 = vadd.f32 %v103, %v246
    %248 = vmatprep.mubr.f32.mxu0 0.0
    %249 = vmatmul.mubr.f32.gmra.mxu0 %v59
    %v250 = vpop.f32.mrf.mxu0
    %v251 = vadd.f32 %v99, %v250
    %v252 = vpop.f32.mrf.mxu0
    %v253 = vadd.f32 %v103, %v252
    %254 = vmatprep.mubr.f32.mxu0 0.0
    %255 = vmatmul.mubr.f32.gmra.mxu0 %v60
    %v256 = vpop.f32.mrf.mxu0
    %v257 = vadd.f32 %v99, %v256
    %v258 = vpop.f32.mrf.mxu0
    %v259 = vadd.f32 %v103, %v258
    %260 = vmatprep.mubr.f32.mxu0 0.0
    %261 = vmatmul.mubr.f32.gmra.mxu0 %v61
    %v262 = vpop.f32.mrf.mxu0
    %v263 = vadd.f32 %v99, %v262
    %v264 = vpop.f32.mrf.mxu0
    %v265 = vadd.f32 %v103, %v264
    %266 = vdwg.mxu0
    %v267 = vmax.f32 %v173, 0.0
    %v268 = vmax.f32 %v175, 0.0
    %v269 = vmax.f32 %v179, 0.0
    %v270 = vmax.f32 %v181, 0.0
    %v271 = vmax.f32 %v185, 0.0
    %v272 = vmax.f32 %v187, 0.0
    %v273 = vmax.f32 %v191, 0.0
    %v274 = vmax.f32 %v193, 0.0
    %v275 = vmax.f32 %v197, 0.0
    %v276 = vmax.f32 %v199, 0.0
    %v277 = vmax.f32 %v203, 0.0
    %v278 = vmax.f32 %v205, 0.0
    %v279 = vmax.f32 %v209, 0.0
    %v280 = vmax.f32 %v211, 0.0
    %v281 = vmax.f32 %v215, 0.0
    %v282 = vmax.f32 %v217, 0.0
    %v283 = vmax.f32 %v221, 0.0
    %v284 = vmax.f32 %v223, 0.0
    %v285 = vmax.f32 %v227, 0.0
    %v286 = vmax.f32 %v229, 0.0
    %v287 = vmax.f32 %v233, 0.0
    %v288 = vmax.f32 %v235, 0.0
    %v289 = vmax.f32 %v239, 0.0
    %v290 = vmax.f32 %v241, 0.0
    %v291 = vmax.f32 %v245, 0.0
    %v292 = vmax.f32 %v247, 0.0
    %v293 = vmax.f32 %v251, 0.0
    %v294 = vmax.f32 %v253, 0.0
    %v295 = vmax.f32 %v257, 0.0
    %v296 = vmax.f32 %v259, 0.0
    %v297 = vmax.f32 %v263, 0.0
    %v298 = vmax.f32 %v265, 0.0
    %v299 = vmin.f32 %v173, 0.0
    %v300 = vmin.f32 %v175, 0.0
    %v301 = vmin.f32 %v179, 0.0
    %v302 = vmin.f32 %v181, 0.0
    %v303 = vmin.f32 %v185, 0.0
    %v304 = vmin.f32 %v187, 0.0
    %v305 = vmin.f32 %v191, 0.0
    %v306 = vmin.f32 %v193, 0.0
    %v307 = vmin.f32 %v197, 0.0
    %v308 = vmin.f32 %v199, 0.0
    %v309 = vmin.f32 %v203, 0.0
    %v310 = vmin.f32 %v205, 0.0
    %v311 = vmin.f32 %v209, 0.0
    %v312 = vmin.f32 %v211, 0.0
    %v313 = vmin.f32 %v215, 0.0
    %v314 = vmin.f32 %v217, 0.0
    %v315 = vmin.f32 %v221, 0.0
    %v316 = vmin.f32 %v223, 0.0
    %v317 = vmin.f32 %v227, 0.0
    %v318 = vmin.f32 %v229, 0.0
    %v319 = vmin.f32 %v233, 0.0
    %v320 = vmin.f32 %v235, 0.0
    %v321 = vmin.f32 %v239, 0.0
    %v322 = vmin.f32 %v241, 0.0
    %v323 = vmin.f32 %v245, 0.0
    %v324 = vmin.f32 %v247, 0.0
    %v325 = vmin.f32 %v251, 0.0
    %v326 = vmin.f32 %v253, 0.0
    %v327 = vmin.f32 %v257, 0.0
    %v328 = vmin.f32 %v259, 0.0
    %v329 = vmin.f32 %v263, 0.0
    %v330 = vmin.f32 %v265, 0.0
    %v331 = vmul.f32 %v299, 10.0
    %v332 = vmul.f32 %v300, 10.0
    %v333 = vmul.f32 %v301, 10.0
    %v334 = vmul.f32 %v302, 10.0
    %v335 = vmul.f32 %v303, 10.0
    %v336 = vmul.f32 %v304, 10.0
    %v337 = vmul.f32 %v305, 10.0
    %v338 = vmul.f32 %v306, 10.0
    %v339 = vmul.f32 %v307, 10.0
    %v340 = vmul.f32 %v308, 10.0
    %v341 = vmul.f32 %v309, 10.0
    %v342 = vmul.f32 %v310, 10.0
    %v343 = vmul.f32 %v311, 10.0
    %v344 = vmul.f32 %v312, 10.0
    %v345 = vmul.f32 %v313, 10.0
    %v346 = vmul.f32 %v314, 10.0
    %v347 = vmul.f32 %v315, 10.0
    %v348 = vmul.f32 %v316, 10.0
    %v349 = vmul.f32 %v317, 10.0
    %v350 = vmul.f32 %v318, 10.0
    %v351 = vmul.f32 %v319, 10.0
    %v352 = vmul.f32 %v320, 10.0
    %v353 = vmul.f32 %v321, 10.0
    %v354 = vmul.f32 %v322, 10.0
    %v355 = vmul.f32 %v323, 10.0
    %v356 = vmul.f32 %v324, 10.0
    %v357 = vmul.f32 %v325, 10.0
    %v358 = vmul.f32 %v326, 10.0
    %v359 = vmul.f32 %v327, 10.0
    %v360 = vmul.f32 %v328, 10.0
    %v361 = vmul.f32 %v329, 10.0
    %v362 = vmul.f32 %v330, 10.0
    %v363 = vmul.f32 %v331, 1.442695
    %v364 = vpow.pop %v363
    %v365 = vmul.f32 %v332, 1.442695
    %v366 = vpow.pop %v365
    %v367 = vmul.f32 %v333, 1.442695
    %v368 = vpow.pop %v367
    %v369 = vmul.f32 %v334, 1.442695
    %v370 = vpow.pop %v369
    %v371 = vmul.f32 %v335, 1.442695
    %v372 = vpow.pop %v371
    %v373 = vmul.f32 %v336, 1.442695
    %v374 = vpow.pop %v373
    %v375 = vmul.f32 %v337, 1.442695
    %v376 = vpow.pop %v375
    %v377 = vmul.f32 %v338, 1.442695
    %v378 = vpow.pop %v377
    %v379 = vmul.f32 %v339, 1.442695
    %v380 = vpow.pop %v379
    %v381 = vmul.f32 %v340, 1.442695
    %v382 = vpow.pop %v381
    %v383 = vmul.f32 %v341, 1.442695
    %v384 = vpow.pop %v383
    %v385 = vmul.f32 %v342, 1.442695
    %v386 = vpow.pop %v385
    %v387 = vmul.f32 %v343, 1.442695
    %v388 = vpow.pop %v387
    %v389 = vmul.f32 %v344, 1.442695
    %v390 = vpow.pop %v389
    %v391 = vmul.f32 %v345, 1.442695
    %v392 = vpow.pop %v391
    %v393 = vmul.f32 %v346, 1.442695
    %v394 = vpow.pop %v393
    %v395 = vmul.f32 %v347, 1.442695
    %v396 = vpow.pop %v395
    %v397 = vmul.f32 %v348, 1.442695
    %v398 = vpow.pop %v397
    %v399 = vmul.f32 %v349, 1.442695
    %v400 = vpow.pop %v399
    %v401 = vmul.f32 %v350, 1.442695
    %v402 = vpow.pop %v401
    %v403 = vmul.f32 %v351, 1.442695
    %v404 = vpow.pop %v403
    %v405 = vmul.f32 %v352, 1.442695
    %v406 = vpow.pop %v405
    %v407 = vmul.f32 %v353, 1.442695
    %v408 = vpow.pop %v407
    %v409 = vmul.f32 %v354, 1.442695
    %v410 = vpow.pop %v409
    %v411 = vmul.f32 %v355, 1.442695
    %v412 = vpow.pop %v411
    %v413 = vmul.f32 %v356, 1.442695
    %v414 = vpow.pop %v413
    %v415 = vmul.f32 %v357, 1.442695
    %v416 = vpow.pop %v415
    %v417 = vmul.f32 %v358, 1.442695
    %v418 = vpow.pop %v417
    %v419 = vmul.f32 %v359, 1.442695
    %v420 = vpow.pop %v419
    %v421 = vmul.f32 %v360, 1.442695
    %v422 = vpow.pop %v421
    %v423 = vmul.f32 %v361, 1.442695
    %v424 = vpow.pop %v423
    %v425 = vmul.f32 %v362, 1.442695
    %v426 = vpow.pop %v425
    %v427 = vmul.f32 %v364, 0.1
    %v428 = vmul.f32 %v366, 0.1
    %v429 = vmul.f32 %v368, 0.1
    %v430 = vmul.f32 %v370, 0.1
    %v431 = vmul.f32 %v372, 0.1
    %v432 = vmul.f32 %v374, 0.1
    %v433 = vmul.f32 %v376, 0.1
    %v434 = vmul.f32 %v378, 0.1
    %v435 = vmul.f32 %v380, 0.1
    %v436 = vmul.f32 %v382, 0.1
    %v437 = vmul.f32 %v384, 0.1
    %v438 = vmul.f32 %v386, 0.1
    %v439 = vmul.f32 %v388, 0.1
    %v440 = vmul.f32 %v390, 0.1
    %v441 = vmul.f32 %v392, 0.1
    %v442 = vmul.f32 %v394, 0.1
    %v443 = vmul.f32 %v396, 0.1
    %v444 = vmul.f32 %v398, 0.1
    %v445 = vmul.f32 %v400, 0.1
    %v446 = vmul.f32 %v402, 0.1
    %v447 = vmul.f32 %v404, 0.1
    %v448 = vmul.f32 %v406, 0.1
    %v449 = vmul.f32 %v408, 0.1
    %v450 = vmul.f32 %v410, 0.1
    %v451 = vmul.f32 %v412, 0.1
    %v452 = vmul.f32 %v414, 0.1
    %v453 = vmul.f32 %v416, 0.1
    %v454 = vmul.f32 %v418, 0.1
    %v455 = vmul.f32 %v420, 0.1
    %v456 = vmul.f32 %v422, 0.1
    %v457 = vmul.f32 %v424, 0.1
    %v458 = vmul.f32 %v426, 0.1
    %v459 = vadd.f32 %v267, %v427
    %v460 = vadd.f32 %v268, %v428
    %v461 = vadd.f32 %v269, %v429
    %v462 = vadd.f32 %v270, %v430
    %v463 = vadd.f32 %v271, %v431
    %v464 = vadd.f32 %v272, %v432
    %v465 = vadd.f32 %v273, %v433
    %v466 = vadd.f32 %v274, %v434
    %v467 = vadd.f32 %v275, %v435
    %v468 = vadd.f32 %v276, %v436
    %v469 = vadd.f32 %v277, %v437
    %v470 = vadd.f32 %v278, %v438
    %v471 = vadd.f32 %v279, %v439
    %v472 = vadd.f32 %v280, %v440
    %v473 = vadd.f32 %v281, %v441
    %v474 = vadd.f32 %v282, %v442
    %v475 = vadd.f32 %v283, %v443
    %v476 = vadd.f32 %v284, %v444
    %v477 = vadd.f32 %v285, %v445
    %v478 = vadd.f32 %v286, %v446
    %v479 = vadd.f32 %v287, %v447
    %v480 = vadd.f32 %v288, %v448
    %v481 = vadd.f32 %v289, %v449
    %v482 = vadd.f32 %v290, %v450
    %v483 = vadd.f32 %v291, %v451
    %v484 = vadd.f32 %v292, %v452
    %v485 = vadd.f32 %v293, %v453
    %v486 = vadd.f32 %v294, %v454
    %v487 = vadd.f32 %v295, %v455
    %v488 = vadd.f32 %v296, %v456
    %v489 = vadd.f32 %v297, %v457
    %v490 = vadd.f32 %v298, %v458
    %v491 = vld [vmem:[%s3] sm:$0x3]
    %v493 = vlaneseq
    %v494 = vshrl.u32 %v493, 7
    %v495 = vsub.s32 0, %v494
    %v496 = vrot.slane %v491, %v495
    %v497 = vlaneseq
    %v498 = vshrl.u32 %v497, 7
    %v499 = vsub.s32 1, %v498
    %v500 = vrot.slane %v491, %v499
    %v503 = vmul.f32 %v459, %v496
    %v504 = vmul.f32 %v460, %v500
    %v505 = vmul.f32 %v461, %v496
    %v506 = vmul.f32 %v462, %v500
    %v507 = vmul.f32 %v463, %v496
    %v508 = vmul.f32 %v464, %v500
    %v509 = vmul.f32 %v465, %v496
    %v510 = vmul.f32 %v466, %v500
    %v511 = vmul.f32 %v467, %v496
    %v512 = vmul.f32 %v468, %v500
    %v513 = vmul.f32 %v469, %v496
    %v514 = vmul.f32 %v470, %v500
    %v515 = vmul.f32 %v471, %v496
    %v516 = vmul.f32 %v472, %v500
    %v517 = vmul.f32 %v473, %v496
    %v518 = vmul.f32 %v474, %v500
    %v519 = vmul.f32 %v475, %v496
    %v520 = vmul.f32 %v476, %v500
    %v521 = vmul.f32 %v477, %v496
    %v522 = vmul.f32 %v478, %v500
    %v523 = vmul.f32 %v479, %v496
    %v524 = vmul.f32 %v480, %v500
    %v525 = vmul.f32 %v481, %v496
    %v526 = vmul.f32 %v482, %v500
    %v527 = vmul.f32 %v483, %v496
    %v528 = vmul.f32 %v484, %v500
    %v529 = vmul.f32 %v485, %v496
    %v530 = vmul.f32 %v486, %v500
    %v531 = vmul.f32 %v487, %v496
    %v532 = vmul.f32 %v488, %v500
    %v533 = vmul.f32 %v489, %v496
    %v534 = vmul.f32 %v490, %v500
    %v535 = vadd.f32 %v503, %v504
    %536 = vadd.xlane.f32.xlu0 %v535
    %v537 = vpop.xlane.xlu0 %536
    %v538 = vadd.f32 %v505, %v506
    %539 = vadd.xlane.f32.xlu0 %v538
    %v540 = vpop.xlane.xlu0 %539
    %v541 = vadd.f32 %v507, %v508
    %542 = vadd.xlane.f32.xlu0 %v541
    %v543 = vpop.xlane.xlu0 %542
    %v544 = vadd.f32 %v509, %v510
    %545 = vadd.xlane.f32.xlu0 %v544
    %v546 = vpop.xlane.xlu0 %545
    %v547 = vadd.f32 %v511, %v512
    %548 = vadd.xlane.f32.xlu0 %v547
    %v549 = vpop.xlane.xlu0 %548
    %v550 = vadd.f32 %v513, %v514
    %551 = vadd.xlane.f32.xlu0 %v550
    %v552 = vpop.xlane.xlu0 %551
    %v553 = vadd.f32 %v515, %v516
    %554 = vadd.xlane.f32.xlu0 %v553
    %v555 = vpop.xlane.xlu0 %554
    %v556 = vadd.f32 %v517, %v518
    %557 = vadd.xlane.f32.xlu0 %v556
    %v558 = vpop.xlane.xlu0 %557
    %v559 = vadd.f32 %v519, %v520
    %560 = vadd.xlane.f32.xlu0 %v559
    %v561 = vpop.xlane.xlu0 %560
    %v562 = vadd.f32 %v521, %v522
    %563 = vadd.xlane.f32.xlu0 %v562
    %v564 = vpop.xlane.xlu0 %563
    %v565 = vadd.f32 %v523, %v524
    %566 = vadd.xlane.f32.xlu0 %v565
    %v567 = vpop.xlane.xlu0 %566
    %v568 = vadd.f32 %v525, %v526
    %569 = vadd.xlane.f32.xlu0 %v568
    %v570 = vpop.xlane.xlu0 %569
    %v571 = vadd.f32 %v527, %v528
    %572 = vadd.xlane.f32.xlu0 %v571
    %v573 = vpop.xlane.xlu0 %572
    %v574 = vadd.f32 %v529, %v530
    %575 = vadd.xlane.f32.xlu0 %v574
    %v576 = vpop.xlane.xlu0 %575
    %v577 = vadd.f32 %v531, %v532
    %578 = vadd.xlane.f32.xlu0 %v577
    %v579 = vpop.xlane.xlu0 %578
    %v580 = vadd.f32 %v533, %v534
    %581 = vadd.xlane.f32.xlu0 %v580
    %v582 = vpop.xlane.xlu0 %581
    %v599 = vlaneseq
    %v600 = vand.u32 %v599, 127
    %v601 = vlaneseq
    %v602 = vshrl.u32 %v601, 7
    %v603 = vsub.s32 %v600, %v602
    %v604 = vrot.slane %v537, %v603
    %v605 = vadd.s32 %v600, 4294967288
    %v606 = vlaneseq
    %v607 = vshrl.u32 %v606, 7
    %v608 = vsub.s32 %v605, %v607
    %v609 = vrot.slane %v540, %v608
    %vm610 = vcmask 130112
    %v611 = vsel %vm610, %v609, %v604
    %v612 = vadd.s32 %v600, 4294967280
    %v613 = vlaneseq
    %v614 = vshrl.u32 %v613, 7
    %v615 = vsub.s32 %v612, %v614
    %v616 = vrot.slane %v543, %v615
    %vm617 = vcmask 195712
    %v618 = vsel %vm617, %v616, %v611
    %v619 = vadd.s32 %v600, 4294967272
    %v620 = vlaneseq
    %v621 = vshrl.u32 %v620, 7
    %v622 = vsub.s32 %v619, %v621
    %v623 = vrot.slane %v546, %v622
    %vm624 = vcmask 261312
    %v625 = vsel %vm624, %v623, %v618
    %v626 = vadd.s32 %v600, 4294967264
    %v627 = vlaneseq
    %v628 = vshrl.u32 %v627, 7
    %v629 = vsub.s32 %v626, %v628
    %v630 = vrot.slane %v549, %v629
    %vm631 = vcmask 326912
    %v632 = vsel %vm631, %v630, %v625
    %v633 = vadd.s32 %v600, 4294967256
    %v634 = vlaneseq
    %v635 = vshrl.u32 %v634, 7
    %v636 = vsub.s32 %v633, %v635
    %v637 = vrot.slane %v552, %v636
    %vm638 = vcmask 392512
    %v639 = vsel %vm638, %v637, %v632
    %v640 = vadd.s32 %v600, 4294967248
    %v641 = vlaneseq
    %v642 = vshrl.u32 %v641, 7
    %v643 = vsub.s32 %v640, %v642
    %v644 = vrot.slane %v555, %v643
    %vm645 = vcmask 458112
    %v646 = vsel %vm645, %v644, %v639
    %v647 = vadd.s32 %v600, 4294967240
    %v648 = vlaneseq
    %v649 = vshrl.u32 %v648, 7
    %v650 = vsub.s32 %v647, %v649
    %v651 = vrot.slane %v558, %v650
    %vm652 = vcmask 523712
    %v653 = vsel %vm652, %v651, %v646
    %v654 = vadd.s32 %v600, 4294967232
    %v655 = vlaneseq
    %v656 = vshrl.u32 %v655, 7
    %v657 = vsub.s32 %v654, %v656
    %v658 = vrot.slane %v561, %v657
    %vm659 = vcmask 589312
    %v660 = vsel %vm659, %v658, %v653
    %v661 = vadd.s32 %v600, 4294967224
    %v662 = vlaneseq
    %v663 = vshrl.u32 %v662, 7
    %v664 = vsub.s32 %v661, %v663
    %v665 = vrot.slane %v564, %v664
    %vm666 = vcmask 654912
    %v667 = vsel %vm666, %v665, %v660
    %v668 = vadd.s32 %v600, 4294967216
    %v669 = vlaneseq
    %v670 = vshrl.u32 %v669, 7
    %v671 = vsub.s32 %v668, %v670
    %v672 = vrot.slane %v567, %v671
    %vm673 = vcmask 720512
    %v674 = vsel %vm673, %v672, %v667
    %v675 = vadd.s32 %v600, 4294967208
    %v676 = vlaneseq
    %v677 = vshrl.u32 %v676, 7
    %v678 = vsub.s32 %v675, %v677
    %v679 = vrot.slane %v570, %v678
    %vm680 = vcmask 786112
    %v681 = vsel %vm680, %v679, %v674
    %v682 = vadd.s32 %v600, 4294967200
    %v683 = vlaneseq
    %v684 = vshrl.u32 %v683, 7
    %v685 = vsub.s32 %v682, %v684
    %v686 = vrot.slane %v573, %v685
    %vm687 = vcmask 851712
    %v688 = vsel %vm687, %v686, %v681
    %v689 = vadd.s32 %v600, 4294967192
    %v690 = vlaneseq
    %v691 = vshrl.u32 %v690, 7
    %v692 = vsub.s32 %v689, %v691
    %v693 = vrot.slane %v576, %v692
    %vm694 = vcmask 917312
    %v695 = vsel %vm694, %v693, %v688
    %v696 = vadd.s32 %v600, 4294967184
    %v697 = vlaneseq
    %v698 = vshrl.u32 %v697, 7
    %v699 = vsub.s32 %v696, %v698
    %v700 = vrot.slane %v579, %v699
    %vm701 = vcmask 982912
    %v702 = vsel %vm701, %v700, %v695
    %v703 = vadd.s32 %v600, 4294967176
    %v704 = vlaneseq
    %v705 = vshrl.u32 %v704, 7
    %v706 = vsub.s32 %v703, %v705
    %v707 = vrot.slane %v582, %v706
    %vm708 = vcmask 1048512
    %v709 = vsel %vm708, %v707, %v702
    %711 = vst [vmem:[#allocation7] sm:$0x1] %v709
    // Predicated region
    $region26: #{tpu_custom_call.1} parent=1 // pred_check
      _
    $region27: #{tpu_custom_call.1} parent=1 // pred_check_branch
      %713 = sbr.rel (0) target = $region29
    $region28: #{tpu_custom_call.1} parent=1 // pred_region
      %s715 = ssub.s32 16, 16
      %716 = vsyncadd [#allocation4], %s715
      %s718 = sshll.u32 [#allocation7], 4
      %s719 = int_to_ptr.vmem [resolvable:$true] %s718
      %721 = dma.vmem_to_hbm [thread:$0]  %s719, 16, %s4, [#allocation4]
    $region29: #{tpu_custom_call.1} parent=1 // pred_fallthru
      _
    // Predicated region
    $region30: #{tpu_custom_call.1} parent=1 // pred_check
      _
    $region31: #{tpu_custom_call.1} parent=1 // pred_check_branch
      %723 = sbr.rel (0) target = $region33
    $region32: #{tpu_custom_call.1} parent=1 // pred_region
      %724 = dma.done [#allocation4], 16
    $region33: #{tpu_custom_call.1} parent=1 // pred_fallthru
      _
    %725 = vsyncpa [#allocation3], 1
    %726 = vsyncpa [#allocation6], 1
    %727 = vsyncpa [#allocation4], 1

// kernel: tpu_custom_call.1
$region0: #{tpu_custom_call.1}
  #allocation0 [shape = 'u32[]', space=smem, size = 0x4, offset = 0x4, fixed_abs, tag = 'smem constant byte address 0x4 - core index']
  #allocation1 [shape = 'u32[144,128]{1,0:T(1,128)}', space=vmem, size = 0x12000, scoped, tag = 'internal scratch']
  %s0 = inlined_call_operand.hbm [shape: f32[128,128], index: 0, kind: input, shape index: {}]
  %s1 = inlined_call_operand.hbm [shape: f32[128,256], index: 1, kind: input, shape index: {}]
  %s2 = inlined_call_operand.vmem [shape: f32[1,256], index: 2, kind: input, shape index: {}]
  %s3 = inlined_call_operand.vmem [shape: f32[1,256], index: 3, kind: input, shape index: {}]
  %s4 = inlined_call_operand.hbm [shape: f32[1,128], index: 4, kind: output, shape index: {}]
  %s5 = sld [smem:[#allocation0]]
  $region34: #{tpu_custom_call.1} parent=0
    _
  %s7 = ssub.s32 1, %s5
  %s8 = scalar_select 0, %s7, %s5
  $region1: #{tpu_custom_call.1} parent=0
    #allocation2 [shape = 'u8[65536]{0}', space=vmem, size = 0x10000, scoped, tag = 'input window, operand 0, single buffered']
    #allocation3 [shape = 's32[1]{0}', space=sflag, size = 0x4, scoped, tag = 'scoped memory for tpu_custom_call.1']
    #allocation4 [shape = 's32[1]{0}', space=sflag, size = 0x4, scoped, tag = 'scoped memory for tpu_custom_call.1']
    #allocation5 [shape = 'u8[131072]{0}', space=vmem, size = 0x20000, scoped, tag = 'input window, operand 1, single buffered']
    #allocation6 [shape = 's32[1]{0}', space=sflag, size = 0x4, scoped, tag = 'scoped memory for tpu_custom_call.1']
    #allocation7 [shape = 'u8[512]{0}', space=vmem, size = 0x400, scoped, tag = 'output window, operand 0, single buffered']
    %9 = vsyncpa [#allocation3], 0
    %10 = vsyncpa [#allocation6], 0
    %11 = vsyncpa [#allocation4], 0
    // Predicated region
    $region2: #{tpu_custom_call.1} parent=1 // pred_check
      _
    $region3: #{tpu_custom_call.1} parent=1 // pred_check_branch
      %13 = sbr.rel (0) target = $region5
    $region4: #{tpu_custom_call.1} parent=1 // pred_region
      %s15 = ssub.s32 2048, 2048
      %16 = vsyncadd [#allocation3], %s15
      %s17 = sshll.u32 [#allocation2], 4
      %s18 = int_to_ptr.vmem [resolvable:$true] %s17
      %23 = dma.hbm_to_vmem [thread:$0]  %s0, 2048, %s18, [#allocation3], 128, 128, 8
    $region5: #{tpu_custom_call.1} parent=1 // pred_fallthru
      _
    // Predicated region
    $region6: #{tpu_custom_call.1} parent=1 // pred_check
      _
    $region7: #{tpu_custom_call.1} parent=1 // pred_check_branch
      %25 = sbr.rel (0) target = $region9
    $region8: #{tpu_custom_call.1} parent=1 // pred_region
      %s27 = ssub.s32 4096, 4096
      %28 = vsyncadd [#allocation6], %s27
      %s29 = sshll.u32 [#allocation5], 4
      %s30 = int_to_ptr.vmem [resolvable:$true] %s29
      %35 = dma.hbm_to_vmem [thread:$0]  %s1, 4096, %s30, [#allocation6], 256, 256, 16
    $region9: #{tpu_custom_call.1} parent=1 // pred_fallthru
      _
    // Predicated region
    $region10: #{tpu_custom_call.1} parent=1 // pred_check
      _
    $region11: #{tpu_custom_call.1} parent=1 // pred_check_branch
      %37 = sbr.rel (0) target = $region13
    $region12: #{tpu_custom_call.1} parent=1 // pred_region
      _
    $region13: #{tpu_custom_call.1} parent=1 // pred_fallthru
      _
    // Predicated region
    $region14: #{tpu_custom_call.1} parent=1 // pred_check
      _
    $region15: #{tpu_custom_call.1} parent=1 // pred_check_branch
      %39 = sbr.rel (0) target = $region17
    $region16: #{tpu_custom_call.1} parent=1 // pred_region
      _
    $region17: #{tpu_custom_call.1} parent=1 // pred_fallthru
      _
    // Predicated region
    $region18: #{tpu_custom_call.1} parent=1 // pred_check
      _
    $region19: #{tpu_custom_call.1} parent=1 // pred_check_branch
      %41 = sbr.rel (0) target = $region21
    $region20: #{tpu_custom_call.1} parent=1 // pred_region
      %42 = dma.done [#allocation3], 2048
    $region21: #{tpu_custom_call.1} parent=1 // pred_fallthru
      _
    // Predicated region
    $region22: #{tpu_custom_call.1} parent=1 // pred_check
      _
    $region23: #{tpu_custom_call.1} parent=1 // pred_check_branch
      %44 = sbr.rel (0) target = $region25
    $region24: #{tpu_custom_call.1} parent=1 // pred_region
      %45 = dma.done [#allocation6], 4096
    $region25: #{tpu_custom_call.1} parent=1 // pred_fallthru
      _
    %v46 = vld [vmem:[#allocation2] sm:$0xff]
    %v47 = vld [vmem:[#allocation2 + $0x8] sm:$0xff]
    %v48 = vld [vmem:[#allocation2 + $0x10] sm:$0xff]
    %v49 = vld [vmem:[#allocation2 + $0x18] sm:$0xff]
    %v50 = vld [vmem:[#allocation2 + $0x20] sm:$0xff]
    %v51 = vld [vmem:[#allocation2 + $0x28] sm:$0xff]
    %v52 = vld [vmem:[#allocation2 + $0x30] sm:$0xff]
    %v53 = vld [vmem:[#allocation2 + $0x38] sm:$0xff]
    %v54 = vld [vmem:[#allocation2 + $0x40] sm:$0xff]
    %v55 = vld [vmem:[#allocation2 + $0x48] sm:$0xff]
    %v56 = vld [vmem:[#allocation2 + $0x50] sm:$0xff]
    %v57 = vld [vmem:[#allocation2 + $0x58] sm:$0xff]
    %v58 = vld [vmem:[#allocation2 + $0x60] sm:$0xff]
    %v59 = vld [vmem:[#allocation2 + $0x68] sm:$0xff]
    %v60 = vld [vmem:[#allocation2 + $0x70] sm:$0xff]
    %v61 = vld [vmem:[#allocation2 + $0x78] sm:$0xff]
    %v62 = vld [vmem:[#allocation5] sm:$0xff]
    %v63 = vld [vmem:[#allocation5 + $0x8] sm:$0xff]
    %v64 = vld [vmem:[#allocation5 + $0x10] sm:$0xff]
    %v65 = vld [vmem:[#allocation5 + $0x18] sm:$0xff]
    %v66 = vld [vmem:[#allocation5 + $0x20] sm:$0xff]
    %v67 = vld [vmem:[#allocation5 + $0x28] sm:$0xff]
    %v68 = vld [vmem:[#allocation5 + $0x30] sm:$0xff]
    %v69 = vld [vmem:[#allocation5 + $0x38] sm:$0xff]
    %v70 = vld [vmem:[#allocation5 + $0x40] sm:$0xff]
    %v71 = vld [vmem:[#allocation5 + $0x48] sm:$0xff]
    %v72 = vld [vmem:[#allocation5 + $0x50] sm:$0xff]
    %v73 = vld [vmem:[#allocation5 + $0x58] sm:$0xff]
    %v74 = vld [vmem:[#allocation5 + $0x60] sm:$0xff]
    %v75 = vld [vmem:[#allocation5 + $0x68] sm:$0xff]
    %v76 = vld [vmem:[#allocation5 + $0x70] sm:$0xff]
    %v77 = vld [vmem:[#allocation5 + $0x78] sm:$0xff]
    %v78 = vld [vmem:[#allocation5 + $0x80] sm:$0xff]
    %v79 = vld [vmem:[#allocation5 + $0x88] sm:$0xff]
    %v80 = vld [vmem:[#allocation5 + $0x90] sm:$0xff]
    %v81 = vld [vmem:[#allocation5 + $0x98] sm:$0xff]
    %v82 = vld [vmem:[#allocation5 + $0xa0] sm:$0xff]
    %v83 = vld [vmem:[#allocation5 + $0xa8] sm:$0xff]
    %v84 = vld [vmem:[#allocation5 + $0xb0] sm:$0xff]
    %v85 = vld [vmem:[#allocation5 + $0xb8] sm:$0xff]
    %v86 = vld [vmem:[#allocation5 + $0xc0] sm:$0xff]
    %v87 = vld [vmem:[#allocation5 + $0xc8] sm:$0xff]
    %v88 = vld [vmem:[#allocation5 + $0xd0] sm:$0xff]
    %v89 = vld [vmem:[#allocation5 + $0xd8] sm:$0xff]
    %v90 = vld [vmem:[#allocation5 + $0xe0] sm:$0xff]
    %v91 = vld [vmem:[#allocation5 + $0xe8] sm:$0xff]
    %v92 = vld [vmem:[#allocation5 + $0xf0] sm:$0xff]
    %v93 = vld [vmem:[#allocation5 + $0xf8] sm:$0xff]
    %v94 = vld [vmem:[%s2] sm:$0x3]
    %v96 = vlaneseq
    %v97 = vshrl.u32 %v96, 7
    %v98 = vsub.s32 0, %v97
    %v99 = vrot.slane %v94, %v98
    %v100 = vlaneseq
    %v101 = vshrl.u32 %v100, 7
    %v102 = vsub.s32 1, %v101
    %v103 = vrot.slane %v94, %v102
    %106 = vmatprep.subr.mxu0 %v93
    %107 = vmatpush1.msra.mxu0 %v92
    %108 = vmatprep.subr.mxu0 %v91
    %109 = vmatpush1.msra.mxu0 %v90
    %110 = vmatprep.subr.mxu0 %v89
    %111 = vmatpush1.msra.mxu0 %v88
    %112 = vmatprep.subr.mxu0 %v87
    %113 = vmatpush1.msra.mxu0 %v86
    %114 = vmatprep.subr.mxu0 %v85
    %115 = vmatpush1.msra.mxu0 %v84
    %116 = vmatprep.subr.mxu0 %v83
    %117 = vmatpush1.msra.mxu0 %v82
    %118 = vmatprep.subr.mxu0 %v81
    %119 = vmatpush1.msra.mxu0 %v80
    %120 = vmatprep.subr.mxu0 %v79
    %121 = vmatpush1.msra.mxu0 %v78
    %122 = vmatprep.subr.mxu0 %v77
    %123 = vmatpush1.msra.mxu0 %v76
    %124 = vmatprep.subr.mxu0 %v75
    %125 = vmatpush1.msra.mxu0 %v74
    %126 = vmatprep.subr.mxu0 %v73
    %127 = vmatpush1.msra.mxu0 %v72
    %128 = vmatprep.subr.mxu0 %v71
    %129 = vmatpush1.msra.mxu0 %v70
    %130 = vmatprep.subr.mxu0 %v69
    %131 = vmatpush1.msra.mxu0 %v68
    %132 = vmatprep.subr.mxu0 %v67
    %133 = vmatpush1.msra.mxu0 %v66
    %134 = vmatprep.subr.mxu0 %v65
    %135 = vmatpush1.msra.mxu0 %v64
    %136 = vmatprep.subr.mxu0 %v63
    %137 = vmatpush1.msra.mxu0 %v62
    %138 = vmatprep.subr.mxu0 0.0
    %139 = vmatpush2.msra.mxu0 0.0
    %140 = vmatprep.subr.mxu0 0.0
    %141 = vmatpush2.msra.mxu0 0.0
    %142 = vmatprep.subr.mxu0 0.0
    %143 = vmatpush2.msra.mxu0 0.0
    %144 = vmatprep.subr.mxu0 0.0
    %145 = vmatpush2.msra.mxu0 0.0
    %146 = vmatprep.subr.mxu0 0.0
    %147 = vmatpush2.msra.mxu0 0.0
    %148 = vmatprep.subr.mxu0 0.0
    %149 = vmatpush2.msra.mxu0 0.0
    %150 = vmatprep.subr.mxu0 0.0
    %151 = vmatpush2.msra.mxu0 0.0
    %152 = vmatprep.subr.mxu0 0.0
    %153 = vmatpush2.msra.mxu0 0.0
    %154 = vmatprep.subr.mxu0 0.0
    %155 = vmatpush2.msra.mxu0 0.0
    %156 = vmatprep.subr.mxu0 0.0
    %157 = vmatpush2.msra.mxu0 0.0
    %158 = vmatprep.subr.mxu0 0.0
    %159 = vmatpush2.msra.mxu0 0.0
    %160 = vmatprep.subr.mxu0 0.0
    %161 = vmatpush2.msra.mxu0 0.0
    %162 = vmatprep.subr.mxu0 0.0
    %163 = vmatpush2.msra.mxu0 0.0
    %164 = vmatprep.subr.mxu0 0.0
    %165 = vmatpush2.msra.mxu0 0.0
    %166 = vmatprep.subr.mxu0 0.0
    %167 = vmatpush2.msra.mxu0 0.0
    %168 = vmatprep.subr.mxu0 0.0
    %169 = vmatpush2.msra.mxu0 0.0
    %170 = vmatprep.mubr.f32.mxu0 0.0
    %171 = vmatmul.mubr.f32.gmra.mxu0 %v46
    %v172 = vpop.f32.mrf.mxu0
    %v173 = vadd.f32 %v99, %v172
    %v174 = vpop.f32.mrf.mxu0
    %v175 = vadd.f32 %v103, %v174
    %176 = vmatprep.mubr.f32.mxu0 0.0
    %177 = vmatmul.mubr.f32.gmra.mxu0 %v47
    %v178 = vpop.f32.mrf.mxu0
    %v179 = vadd.f32 %v99, %v178
    %v180 = vpop.f32.mrf.mxu0
    %v181 = vadd.f32 %v103, %v180
    %182 = vmatprep.mubr.f32.mxu0 0.0
    %183 = vmatmul.mubr.f32.gmra.mxu0 %v48
    %v184 = vpop.f32.mrf.mxu0
    %v185 = vadd.f32 %v99, %v184
    %v186 = vpop.f32.mrf.mxu0
    %v187 = vadd.f32 %v103, %v186
    %188 = vmatprep.mubr.f32.mxu0 0.0
    %189 = vmatmul.mubr.f32.gmra.mxu0 %v49
    %v190 = vpop.f32.mrf.mxu0
    %v191 = vadd.f32 %v99, %v190
    %v192 = vpop.f32.mrf.mxu0
    %v193 = vadd.f32 %v103, %v192
    %194 = vmatprep.mubr.f32.mxu0 0.0
    %195 = vmatmul.mubr.f32.gmra.mxu0 %v50
    %v196 = vpop.f32.mrf.mxu0
    %v197 = vadd.f32 %v99, %v196
    %v198 = vpop.f32.mrf.mxu0
    %v199 = vadd.f32 %v103, %v198
    %200 = vmatprep.mubr.f32.mxu0 0.0
    %201 = vmatmul.mubr.f32.gmra.mxu0 %v51
    %v202 = vpop.f32.mrf.mxu0
    %v203 = vadd.f32 %v99, %v202
    %v204 = vpop.f32.mrf.mxu0
    %v205 = vadd.f32 %v103, %v204
    %206 = vmatprep.mubr.f32.mxu0 0.0
    %207 = vmatmul.mubr.f32.gmra.mxu0 %v52
    %v208 = vpop.f32.mrf.mxu0
    %v209 = vadd.f32 %v99, %v208
    %v210 = vpop.f32.mrf.mxu0
    %v211 = vadd.f32 %v103, %v210
    %212 = vmatprep.mubr.f32.mxu0 0.0
    %213 = vmatmul.mubr.f32.gmra.mxu0 %v53
    %v214 = vpop.f32.mrf.mxu0
    %v215 = vadd.f32 %v99, %v214
    %v216 = vpop.f32.mrf.mxu0
    %v217 = vadd.f32 %v103, %v216
    %218 = vmatprep.mubr.f32.mxu0 0.0
    %219 = vmatmul.mubr.f32.gmra.mxu0 %v54
    %v220 = vpop.f32.mrf.mxu0
    %v221 = vadd.f32 %v99, %v220
    %v222 = vpop.f32.mrf.mxu0
    %v223 = vadd.f32 %v103, %v222
    %224 = vmatprep.mubr.f32.mxu0 0.0
    %225 = vmatmul.mubr.f32.gmra.mxu0 %v55
    %v226 = vpop.f32.mrf.mxu0
    %v227 = vadd.f32 %v99, %v226
    %v228 = vpop.f32.mrf.mxu0
    %v229 = vadd.f32 %v103, %v228
    %230 = vmatprep.mubr.f32.mxu0 0.0
    %231 = vmatmul.mubr.f32.gmra.mxu0 %v56
    %v232 = vpop.f32.mrf.mxu0
    %v233 = vadd.f32 %v99, %v232
    %v234 = vpop.f32.mrf.mxu0
    %v235 = vadd.f32 %v103, %v234
    %236 = vmatprep.mubr.f32.mxu0 0.0
    %237 = vmatmul.mubr.f32.gmra.mxu0 %v57
    %v238 = vpop.f32.mrf.mxu0
    %v239 = vadd.f32 %v99, %v238
    %v240 = vpop.f32.mrf.mxu0
    %v241 = vadd.f32 %v103, %v240
    %242 = vmatprep.mubr.f32.mxu0 0.0
    %243 = vmatmul.mubr.f32.gmra.mxu0 %v58
    %v244 = vpop.f32.mrf.mxu0
    %v245 = vadd.f32 %v99, %v244
    %v246 = vpop.f32.mrf.mxu0
    %v247 = vadd.f32 %v103, %v246
    %248 = vmatprep.mubr.f32.mxu0 0.0
    %249 = vmatmul.mubr.f32.gmra.mxu0 %v59
    %v250 = vpop.f32.mrf.mxu0
    %v251 = vadd.f32 %v99, %v250
    %v252 = vpop.f32.mrf.mxu0
    %v253 = vadd.f32 %v103, %v252
    %254 = vmatprep.mubr.f32.mxu0 0.0
    %255 = vmatmul.mubr.f32.gmra.mxu0 %v60
    %v256 = vpop.f32.mrf.mxu0
    %v257 = vadd.f32 %v99, %v256
    %v258 = vpop.f32.mrf.mxu0
    %v259 = vadd.f32 %v103, %v258
    %260 = vmatprep.mubr.f32.mxu0 0.0
    %261 = vmatmul.mubr.f32.gmra.mxu0 %v61
    %v262 = vpop.f32.mrf.mxu0
    %v263 = vadd.f32 %v99, %v262
    %v264 = vpop.f32.mrf.mxu0
    %v265 = vadd.f32 %v103, %v264
    %266 = vdwg.mxu0
    %v267 = vmax.f32 %v173, 0.0
    %v268 = vmax.f32 %v175, 0.0
    %v269 = vmax.f32 %v179, 0.0
    %v270 = vmax.f32 %v181, 0.0
    %v271 = vmax.f32 %v185, 0.0
    %v272 = vmax.f32 %v187, 0.0
    %v273 = vmax.f32 %v191, 0.0
    %v274 = vmax.f32 %v193, 0.0
    %v275 = vmax.f32 %v197, 0.0
    %v276 = vmax.f32 %v199, 0.0
    %v277 = vmax.f32 %v203, 0.0
    %v278 = vmax.f32 %v205, 0.0
    %v279 = vmax.f32 %v209, 0.0
    %v280 = vmax.f32 %v211, 0.0
    %v281 = vmax.f32 %v215, 0.0
    %v282 = vmax.f32 %v217, 0.0
    %v283 = vmax.f32 %v221, 0.0
    %v284 = vmax.f32 %v223, 0.0
    %v285 = vmax.f32 %v227, 0.0
    %v286 = vmax.f32 %v229, 0.0
    %v287 = vmax.f32 %v233, 0.0
    %v288 = vmax.f32 %v235, 0.0
    %v289 = vmax.f32 %v239, 0.0
    %v290 = vmax.f32 %v241, 0.0
    %v291 = vmax.f32 %v245, 0.0
    %v292 = vmax.f32 %v247, 0.0
    %v293 = vmax.f32 %v251, 0.0
    %v294 = vmax.f32 %v253, 0.0
    %v295 = vmax.f32 %v257, 0.0
    %v296 = vmax.f32 %v259, 0.0
    %v297 = vmax.f32 %v263, 0.0
    %v298 = vmax.f32 %v265, 0.0
    %v299 = vmin.f32 %v173, 0.0
    %v300 = vmin.f32 %v175, 0.0
    %v301 = vmin.f32 %v179, 0.0
    %v302 = vmin.f32 %v181, 0.0
    %v303 = vmin.f32 %v185, 0.0
    %v304 = vmin.f32 %v187, 0.0
    %v305 = vmin.f32 %v191, 0.0
    %v306 = vmin.f32 %v193, 0.0
    %v307 = vmin.f32 %v197, 0.0
    %v308 = vmin.f32 %v199, 0.0
    %v309 = vmin.f32 %v203, 0.0
    %v310 = vmin.f32 %v205, 0.0
    %v311 = vmin.f32 %v209, 0.0
    %v312 = vmin.f32 %v211, 0.0
    %v313 = vmin.f32 %v215, 0.0
    %v314 = vmin.f32 %v217, 0.0
    %v315 = vmin.f32 %v221, 0.0
    %v316 = vmin.f32 %v223, 0.0
    %v317 = vmin.f32 %v227, 0.0
    %v318 = vmin.f32 %v229, 0.0
    %v319 = vmin.f32 %v233, 0.0
    %v320 = vmin.f32 %v235, 0.0
    %v321 = vmin.f32 %v239, 0.0
    %v322 = vmin.f32 %v241, 0.0
    %v323 = vmin.f32 %v245, 0.0
    %v324 = vmin.f32 %v247, 0.0
    %v325 = vmin.f32 %v251, 0.0
    %v326 = vmin.f32 %v253, 0.0
    %v327 = vmin.f32 %v257, 0.0
    %v328 = vmin.f32 %v259, 0.0
    %v329 = vmin.f32 %v263, 0.0
    %v330 = vmin.f32 %v265, 0.0
    %v331 = vmul.f32 %v299, 10.0
    %v332 = vmul.f32 %v300, 10.0
    %v333 = vmul.f32 %v301, 10.0
    %v334 = vmul.f32 %v302, 10.0
    %v335 = vmul.f32 %v303, 10.0
    %v336 = vmul.f32 %v304, 10.0
    %v337 = vmul.f32 %v305, 10.0
    %v338 = vmul.f32 %v306, 10.0
    %v339 = vmul.f32 %v307, 10.0
    %v340 = vmul.f32 %v308, 10.0
    %v341 = vmul.f32 %v309, 10.0
    %v342 = vmul.f32 %v310, 10.0
    %v343 = vmul.f32 %v311, 10.0
    %v344 = vmul.f32 %v312, 10.0
    %v345 = vmul.f32 %v313, 10.0
    %v346 = vmul.f32 %v314, 10.0
    %v347 = vmul.f32 %v315, 10.0
    %v348 = vmul.f32 %v316, 10.0
    %v349 = vmul.f32 %v317, 10.0
    %v350 = vmul.f32 %v318, 10.0
    %v351 = vmul.f32 %v319, 10.0
    %v352 = vmul.f32 %v320, 10.0
    %v353 = vmul.f32 %v321, 10.0
    %v354 = vmul.f32 %v322, 10.0
    %v355 = vmul.f32 %v323, 10.0
    %v356 = vmul.f32 %v324, 10.0
    %v357 = vmul.f32 %v325, 10.0
    %v358 = vmul.f32 %v326, 10.0
    %v359 = vmul.f32 %v327, 10.0
    %v360 = vmul.f32 %v328, 10.0
    %v361 = vmul.f32 %v329, 10.0
    %v362 = vmul.f32 %v330, 10.0
    %v363 = vmul.f32 %v331, 1.442695
    %v364 = vpow.pop %v363
    %v365 = vmul.f32 %v332, 1.442695
    %v366 = vpow.pop %v365
    %v367 = vmul.f32 %v333, 1.442695
    %v368 = vpow.pop %v367
    %v369 = vmul.f32 %v334, 1.442695
    %v370 = vpow.pop %v369
    %v371 = vmul.f32 %v335, 1.442695
    %v372 = vpow.pop %v371
    %v373 = vmul.f32 %v336, 1.442695
    %v374 = vpow.pop %v373
    %v375 = vmul.f32 %v337, 1.442695
    %v376 = vpow.pop %v375
    %v377 = vmul.f32 %v338, 1.442695
    %v378 = vpow.pop %v377
    %v379 = vmul.f32 %v339, 1.442695
    %v380 = vpow.pop %v379
    %v381 = vmul.f32 %v340, 1.442695
    %v382 = vpow.pop %v381
    %v383 = vmul.f32 %v341, 1.442695
    %v384 = vpow.pop %v383
    %v385 = vmul.f32 %v342, 1.442695
    %v386 = vpow.pop %v385
    %v387 = vmul.f32 %v343, 1.442695
    %v388 = vpow.pop %v387
    %v389 = vmul.f32 %v344, 1.442695
    %v390 = vpow.pop %v389
    %v391 = vmul.f32 %v345, 1.442695
    %v392 = vpow.pop %v391
    %v393 = vmul.f32 %v346, 1.442695
    %v394 = vpow.pop %v393
    %v395 = vmul.f32 %v347, 1.442695
    %v396 = vpow.pop %v395
    %v397 = vmul.f32 %v348, 1.442695
    %v398 = vpow.pop %v397
    %v399 = vmul.f32 %v349, 1.442695
    %v400 = vpow.pop %v399
    %v401 = vmul.f32 %v350, 1.442695
    %v402 = vpow.pop %v401
    %v403 = vmul.f32 %v351, 1.442695
    %v404 = vpow.pop %v403
    %v405 = vmul.f32 %v352, 1.442695
    %v406 = vpow.pop %v405
    %v407 = vmul.f32 %v353, 1.442695
    %v408 = vpow.pop %v407
    %v409 = vmul.f32 %v354, 1.442695
    %v410 = vpow.pop %v409
    %v411 = vmul.f32 %v355, 1.442695
    %v412 = vpow.pop %v411
    %v413 = vmul.f32 %v356, 1.442695
    %v414 = vpow.pop %v413
    %v415 = vmul.f32 %v357, 1.442695
    %v416 = vpow.pop %v415
    %v417 = vmul.f32 %v358, 1.442695
    %v418 = vpow.pop %v417
    %v419 = vmul.f32 %v359, 1.442695
    %v420 = vpow.pop %v419
    %v421 = vmul.f32 %v360, 1.442695
    %v422 = vpow.pop %v421
    %v423 = vmul.f32 %v361, 1.442695
    %v424 = vpow.pop %v423
    %v425 = vmul.f32 %v362, 1.442695
    %v426 = vpow.pop %v425
    %v427 = vmul.f32 %v364, 0.1
    %v428 = vmul.f32 %v366, 0.1
    %v429 = vmul.f32 %v368, 0.1
    %v430 = vmul.f32 %v370, 0.1
    %v431 = vmul.f32 %v372, 0.1
    %v432 = vmul.f32 %v374, 0.1
    %v433 = vmul.f32 %v376, 0.1
    %v434 = vmul.f32 %v378, 0.1
    %v435 = vmul.f32 %v380, 0.1
    %v436 = vmul.f32 %v382, 0.1
    %v437 = vmul.f32 %v384, 0.1
    %v438 = vmul.f32 %v386, 0.1
    %v439 = vmul.f32 %v388, 0.1
    %v440 = vmul.f32 %v390, 0.1
    %v441 = vmul.f32 %v392, 0.1
    %v442 = vmul.f32 %v394, 0.1
    %v443 = vmul.f32 %v396, 0.1
    %v444 = vmul.f32 %v398, 0.1
    %v445 = vmul.f32 %v400, 0.1
    %v446 = vmul.f32 %v402, 0.1
    %v447 = vmul.f32 %v404, 0.1
    %v448 = vmul.f32 %v406, 0.1
    %v449 = vmul.f32 %v408, 0.1
    %v450 = vmul.f32 %v410, 0.1
    %v451 = vmul.f32 %v412, 0.1
    %v452 = vmul.f32 %v414, 0.1
    %v453 = vmul.f32 %v416, 0.1
    %v454 = vmul.f32 %v418, 0.1
    %v455 = vmul.f32 %v420, 0.1
    %v456 = vmul.f32 %v422, 0.1
    %v457 = vmul.f32 %v424, 0.1
    %v458 = vmul.f32 %v426, 0.1
    %v459 = vadd.f32 %v267, %v427
    %v460 = vadd.f32 %v268, %v428
    %v461 = vadd.f32 %v269, %v429
    %v462 = vadd.f32 %v270, %v430
    %v463 = vadd.f32 %v271, %v431
    %v464 = vadd.f32 %v272, %v432
    %v465 = vadd.f32 %v273, %v433
    %v466 = vadd.f32 %v274, %v434
    %v467 = vadd.f32 %v275, %v435
    %v468 = vadd.f32 %v276, %v436
    %v469 = vadd.f32 %v277, %v437
    %v470 = vadd.f32 %v278, %v438
    %v471 = vadd.f32 %v279, %v439
    %v472 = vadd.f32 %v280, %v440
    %v473 = vadd.f32 %v281, %v441
    %v474 = vadd.f32 %v282, %v442
    %v475 = vadd.f32 %v283, %v443
    %v476 = vadd.f32 %v284, %v444
    %v477 = vadd.f32 %v285, %v445
    %v478 = vadd.f32 %v286, %v446
    %v479 = vadd.f32 %v287, %v447
    %v480 = vadd.f32 %v288, %v448
    %v481 = vadd.f32 %v289, %v449
    %v482 = vadd.f32 %v290, %v450
    %v483 = vadd.f32 %v291, %v451
    %v484 = vadd.f32 %v292, %v452
    %v485 = vadd.f32 %v293, %v453
    %v486 = vadd.f32 %v294, %v454
    %v487 = vadd.f32 %v295, %v455
    %v488 = vadd.f32 %v296, %v456
    %v489 = vadd.f32 %v297, %v457
    %v490 = vadd.f32 %v298, %v458
    %v491 = vld [vmem:[%s3] sm:$0x3]
    %v493 = vlaneseq
    %v494 = vshrl.u32 %v493, 7
    %v495 = vsub.s32 0, %v494
    %v496 = vrot.slane %v491, %v495
    %v497 = vlaneseq
    %v498 = vshrl.u32 %v497, 7
    %v499 = vsub.s32 1, %v498
    %v500 = vrot.slane %v491, %v499
    %v503 = vmul.f32 %v459, %v496
    %v504 = vmul.f32 %v460, %v500
    %v505 = vmul.f32 %v461, %v496
    %v506 = vmul.f32 %v462, %v500
    %v507 = vmul.f32 %v463, %v496
    %v508 = vmul.f32 %v464, %v500
    %v509 = vmul.f32 %v465, %v496
    %v510 = vmul.f32 %v466, %v500
    %v511 = vmul.f32 %v467, %v496
    %v512 = vmul.f32 %v468, %v500
    %v513 = vmul.f32 %v469, %v496
    %v514 = vmul.f32 %v470, %v500
    %v515 = vmul.f32 %v471, %v496
    %v516 = vmul.f32 %v472, %v500
    %v517 = vmul.f32 %v473, %v496
    %v518 = vmul.f32 %v474, %v500
    %v519 = vmul.f32 %v475, %v496
    %v520 = vmul.f32 %v476, %v500
    %v521 = vmul.f32 %v477, %v496
    %v522 = vmul.f32 %v478, %v500
    %v523 = vmul.f32 %v479, %v496
    %v524 = vmul.f32 %v480, %v500
    %v525 = vmul.f32 %v481, %v496
    %v526 = vmul.f32 %v482, %v500
    %v527 = vmul.f32 %v483, %v496
    %v528 = vmul.f32 %v484, %v500
    %v529 = vmul.f32 %v485, %v496
    %v530 = vmul.f32 %v486, %v500
    %v531 = vmul.f32 %v487, %v496
    %v532 = vmul.f32 %v488, %v500
    %v533 = vmul.f32 %v489, %v496
    %v534 = vmul.f32 %v490, %v500
    %v535 = vadd.f32 %v503, %v504
    %536 = vadd.xlane.f32.xlu0 %v535
    %v537 = vpop.xlane.xlu0 %536
    %v538 = vadd.f32 %v505, %v506
    %539 = vadd.xlane.f32.xlu0 %v538
    %v540 = vpop.xlane.xlu0 %539
    %v541 = vadd.f32 %v507, %v508
    %542 = vadd.xlane.f32.xlu0 %v541
    %v543 = vpop.xlane.xlu0 %542
    %v544 = vadd.f32 %v509, %v510
    %545 = vadd.xlane.f32.xlu0 %v544
    %v546 = vpop.xlane.xlu0 %545
    %v547 = vadd.f32 %v511, %v512
    %548 = vadd.xlane.f32.xlu0 %v547
    %v549 = vpop.xlane.xlu0 %548
    %v550 = vadd.f32 %v513, %v514
    %551 = vadd.xlane.f32.xlu0 %v550
    %v552 = vpop.xlane.xlu0 %551
    %v553 = vadd.f32 %v515, %v516
    %554 = vadd.xlane.f32.xlu0 %v553
    %v555 = vpop.xlane.xlu0 %554
    %v556 = vadd.f32 %v517, %v518
    %557 = vadd.xlane.f32.xlu0 %v556
    %v558 = vpop.xlane.xlu0 %557
    %v559 = vadd.f32 %v519, %v520
    %560 = vadd.xlane.f32.xlu0 %v559
    %v561 = vpop.xlane.xlu0 %560
    %v562 = vadd.f32 %v521, %v522
    %563 = vadd.xlane.f32.xlu0 %v562
    %v564 = vpop.xlane.xlu0 %563
    %v565 = vadd.f32 %v523, %v524
    %566 = vadd.xlane.f32.xlu0 %v565
    %v567 = vpop.xlane.xlu0 %566
    %v568 = vadd.f32 %v525, %v526
    %569 = vadd.xlane.f32.xlu0 %v568
    %v570 = vpop.xlane.xlu0 %569
    %v571 = vadd.f32 %v527, %v528
    %572 = vadd.xlane.f32.xlu0 %v571
    %v573 = vpop.xlane.xlu0 %572
    %v574 = vadd.f32 %v529, %v530
    %575 = vadd.xlane.f32.xlu0 %v574
    %v576 = vpop.xlane.xlu0 %575
    %v577 = vadd.f32 %v531, %v532
    %578 = vadd.xlane.f32.xlu0 %v577
    %v579 = vpop.xlane.xlu0 %578
    %v580 = vadd.f32 %v533, %v534
    %581 = vadd.xlane.f32.xlu0 %v580
    %v582 = vpop.xlane.xlu0 %581
    %v599 = vlaneseq
    %v600 = vand.u32 %v599, 127
    %v601 = vlaneseq
    %v602 = vshrl.u32 %v601, 7
    %v603 = vsub.s32 %v600, %v602
    %v604 = vrot.slane %v537, %v603
    %v605 = vadd.s32 %v600, 4294967288
    %v606 = vlaneseq
    %v607 = vshrl.u32 %v606, 7
    %v608 = vsub.s32 %v605, %v607
    %v609 = vrot.slane %v540, %v608
    %vm610 = vcmask 130112
    %v611 = vsel %vm610, %v609, %v604
    %v612 = vadd.s32 %v600, 4294967280
    %v613 = vlaneseq
    %v614 = vshrl.u32 %v613, 7
    %v615 = vsub.s32 %v612, %v614
    %v616 = vrot.slane %v543, %v615
    %vm617 = vcmask 195712
    %v618 = vsel %vm617, %v616, %v611
    %v619 = vadd.s32 %v600, 4294967272
    %v620 = vlaneseq
    %v621 = vshrl.u32 %v620, 7
    %v622 = vsub.s32 %v619, %v621
    %v623 = vrot.slane %v546, %v622
    %vm624 = vcmask 261312
    %v625 = vsel %vm624, %v623, %v618
    %v626 = vadd.s32 %v600, 4294967264
    %v627 = vlaneseq
    %v628 = vshrl.u32 %v627, 7
    %v629 = vsub.s32 %v626, %v628
    %v630 = vrot.slane %v549, %v629
    %vm631 = vcmask 326912
    %v632 = vsel %vm631, %v630, %v625
    %v633 = vadd.s32 %v600, 4294967256
    %v634 = vlaneseq
    %v635 = vshrl.u32 %v634, 7
    %v636 = vsub.s32 %v633, %v635
    %v637 = vrot.slane %v552, %v636
    %vm638 = vcmask 392512
    %v639 = vsel %vm638, %v637, %v632
    %v640 = vadd.s32 %v600, 4294967248
    %v641 = vlaneseq
    %v642 = vshrl.u32 %v641, 7
    %v643 = vsub.s32 %v640, %v642
    %v644 = vrot.slane %v555, %v643
    %vm645 = vcmask 458112
    %v646 = vsel %vm645, %v644, %v639
    %v647 = vadd.s32 %v600, 4294967240
    %v648 = vlaneseq
    %v649 = vshrl.u32 %v648, 7
    %v650 = vsub.s32 %v647, %v649
    %v651 = vrot.slane %v558, %v650
    %vm652 = vcmask 523712
    %v653 = vsel %vm652, %v651, %v646
    %v654 = vadd.s32 %v600, 4294967232
    %v655 = vlaneseq
    %v656 = vshrl.u32 %v655, 7
    %v657 = vsub.s32 %v654, %v656
    %v658 = vrot.slane %v561, %v657
    %vm659 = vcmask 589312
    %v660 = vsel %vm659, %v658, %v653
    %v661 = vadd.s32 %v600, 4294967224
    %v662 = vlaneseq
    %v663 = vshrl.u32 %v662, 7
    %v664 = vsub.s32 %v661, %v663
    %v665 = vrot.slane %v564, %v664
    %vm666 = vcmask 654912
    %v667 = vsel %vm666, %v665, %v660
    %v668 = vadd.s32 %v600, 4294967216
    %v669 = vlaneseq
    %v670 = vshrl.u32 %v669, 7
    %v671 = vsub.s32 %v668, %v670
    %v672 = vrot.slane %v567, %v671
    %vm673 = vcmask 720512
    %v674 = vsel %vm673, %v672, %v667
    %v675 = vadd.s32 %v600, 4294967208
    %v676 = vlaneseq
    %v677 = vshrl.u32 %v676, 7
    %v678 = vsub.s32 %v675, %v677
    %v679 = vrot.slane %v570, %v678
    %vm680 = vcmask 786112
    %v681 = vsel %vm680, %v679, %v674
    %v682 = vadd.s32 %v600, 4294967200
    %v683 = vlaneseq
    %v684 = vshrl.u32 %v683, 7
    %v685 = vsub.s32 %v682, %v684
    %v686 = vrot.slane %v573, %v685
    %vm687 = vcmask 851712
    %v688 = vsel %vm687, %v686, %v681
    %v689 = vadd.s32 %v600, 4294967192
    %v690 = vlaneseq
    %v691 = vshrl.u32 %v690, 7
    %v692 = vsub.s32 %v689, %v691
    %v693 = vrot.slane %v576, %v692
    %vm694 = vcmask 917312
    %v695 = vsel %vm694, %v693, %v688
    %v696 = vadd.s32 %v600, 4294967184
    %v697 = vlaneseq
    %v698 = vshrl.u32 %v697, 7
    %v699 = vsub.s32 %v696, %v698
    %v700 = vrot.slane %v579, %v699
    %vm701 = vcmask 982912
    %v702 = vsel %vm701, %v700, %v695
    %v703 = vadd.s32 %v600, 4294967176
    %v704 = vlaneseq
    %v705 = vshrl.u32 %v704, 7
    %v706 = vsub.s32 %v703, %v705
    %v707 = vrot.slane %v582, %v706
    %vm708 = vcmask 1048512
    %v709 = vsel %vm708, %v707, %v702
    %711 = vst [vmem:[#allocation7] sm:$0x1] %v709
    // Predicated region
    $region26: #{tpu_custom_call.1} parent=1 // pred_check
      _
    $region27: #{tpu_custom_call.1} parent=1 // pred_check_branch
      %713 = sbr.rel (0) target = $region29
    $region28: #{tpu_custom_call.1} parent=1 // pred_region
      %s715 = ssub.s32 16, 16
      %716 = vsyncadd [#allocation4], %s715
      %s718 = sshll.u32 [#allocation7], 4
      %s719 = int_to_ptr.vmem [resolvable:$true] %s718
      %721 = dma.vmem_to_hbm [thread:$0]  %s719, 16, %s4, [#allocation4]
    $region29: #{tpu_custom_call.1} parent=1 // pred_fallthru
      _
    // Predicated region
    $region30: #{tpu_custom_call.1} parent=1 // pred_check
      _
    $region31: #{tpu_custom_call.1} parent=1 // pred_check_branch
      %723 = sbr.rel (0) target = $region33
    $region32: #{tpu_custom_call.1} parent=1 // pred_region
      %724 = dma.done [#allocation4], 16
    $region33: #{tpu_custom_call.1} parent=1 // pred_fallthru
      _
    %725 = vsyncpa [#allocation3], 1
    %726 = vsyncpa [#allocation6], 1
    %727 = vsyncpa [#allocation4], 1

</llo_original>
